<compile_context>
chip_gen: v6e
topology: v6e:2x2x1
jax: 0.10.0
libtpu: 0.0.40
codegen_flags: <defaults>
</compile_context>

<pallas_src>
import functools
import math

import jax
import jax.numpy as jnp
import numpy as np
from jax.experimental import pallas as pl
from jax.experimental.pallas import tpu as pltpu

THRESHOLD = 1.0 - 0.1  # self.threshold in the PyTorch module


def _round_up(x, m):
    return ((x + m - 1) // m) * m


def _pick_tile_m(M, H):
    """Rows per grid step: multiple of 8 (f32 sublanes), MXU-friendly when
    possible, capped so ~6 f32 copies of a (TILE_M, H) block (double-buffered
    ins/outs + scratch) stay well inside the default scoped-VMEM budget on
    every generation (v7x default scoped VMEM: 32 MiB of 64 MiB physical)."""
    if M <= 256:
        return _round_up(M, 8)
    cap = max(256, ((8 << 20) // (6 * 4 * H)) // 8 * 8)
    return min(1024, cap, _round_up(M, 8))


def _act_kernel(state_ref, te_ref, pos_ref, waug_ref, baug_ref,
                prev_ref, rem_ref, nup_ref,
                state_s, hp_s, *, max_hop):
    """One (TILE_M, H) tile: runs all ACT hops with VMEM-resident state."""
    H = state_ref.shape[-1]

    # init: evolving state in scratch, accumulators directly in output blocks
    state_s[...] = state_ref[...]
    hp_s[...] = jnp.zeros_like(hp_s)
    prev_ref[...] = jnp.zeros_like(prev_ref)
    rem_ref[...] = jnp.zeros_like(rem_ref)
    nup_ref[...] = jnp.zeros_like(nup_ref)

    def hop(t, carry):
        # state = state + time_enc + pos_enc[step]
        st = state_s[...] + te_ref[...] + pos_ref[pl.ds(t, 1), :]

        # One MXU matmul -> [ fn(state) pre-activation | halting logit ]
        fused = jnp.dot(st, waug_ref[...],
                        preferred_element_type=jnp.float32) + baug_ref[...]
        p = jax.nn.sigmoid(fused[:, H:H + 1])          # (TILE_M, 1)  -- EUP
        new_state = jnp.maximum(fused[:, :H], 0.0)     # fn(state) = ReLU(Wx+b)

        hp = hp_s[...]
        rem = rem_ref[...]
        nup = nup_ref[...]

        still = jnp.where(hp < 1.0, 1.0, 0.0)
        cand = hp + p * still
        new_halted = jnp.where(cand > THRESHOLD, still, 0.0)
        still = jnp.where(cand <= THRESHOLD, still, 0.0)
        hp = hp + p * still
        rem = rem + new_halted * (1.0 - hp)
        hp = hp + new_halted * rem
        nup = nup + still + new_halted
        uw = p * still + new_halted * rem              # update_weights

        prev_ref[...] = new_state * uw + prev_ref[...] * (1.0 - uw)
        state_s[...] = new_state
        hp_s[...] = hp
        rem_ref[...] = rem
        nup_ref[...] = nup
        return carry

    # Extra hops beyond the data-dependent stopping point are exact no-ops
    # (halted rows freeze at hp == 1.0), so a fixed max_hop trip count matches
    # the reference while-loop.  Fully unrolled for LLO scheduling visibility.
    jax.lax.fori_loop(0, max_hop, hop, 0, unroll=True)


def act_basic_forward(state, inputs, params, time_enc, pos_enc, max_hop):
    """Mirrors ACT_basic.forward (3-D branch, encoder_output=None, fn=dense+ReLU)."""
    B, S, H = inputs.shape
    M = B * S
    TILE_M = _pick_tile_m(M, H)
    Mp = _round_up(M, TILE_M)

    # ---- layout plumbing in the wrapper: flatten, pad, lane dim = H ----
    state2d = state.reshape(M, H).astype(jnp.float32)
    te2d = jnp.broadcast_to(time_enc[:, :S, :], (B, S, H)).reshape(M, H)
    te2d = te2d.astype(jnp.float32)
    if Mp > M:
        pad = ((0, Mp - M), (0, 0))
        state2d = jnp.pad(state2d, pad)
        te2d = jnp.pad(te2d, pad)

    pos2d = pos_enc[0, :max_hop, :].astype(jnp.float32)          # (max_hop, H)

    # ---- fuse the halting Linear into fn's matmul: [fn_w | p_w], [fn_b | p_b]
    p_col = jnp.pad(params["p_w"].reshape(H, 1), ((0, 0), (0, 127)))   # (H, 128)
    w_aug = jnp.concatenate(
        [params["fn_w"].astype(jnp.float32), p_col.astype(jnp.float32)], axis=1)
    b_aug = jnp.concatenate(
        [params["fn_b"].reshape(1, H),
         jnp.pad(params["p_b"].reshape(1, 1), ((0, 0), (0, 127)))],
        axis=1).astype(jnp.float32)                                    # (1, H+128)

    grid = (Mp // TILE_M,)

    prev2d, rem2d, nup2d = pl.pallas_call(
        functools.partial(_act_kernel, max_hop=max_hop),
        out_shape=(
            jax.ShapeDtypeStruct((Mp, H), jnp.float32),   # previous_state
            jax.ShapeDtypeStruct((Mp, 1), jnp.float32),   # remainders
            jax.ShapeDtypeStruct((Mp, 1), jnp.float32),   # n_updates
        ),
        grid_spec=pltpu.PrefetchScalarGridSpec(
            num_scalar_prefetch=0,
            grid=grid,
            in_specs=[
                pl.BlockSpec((TILE_M, H), lambda i: (i, 0)),     # state tile
                pl.BlockSpec((TILE_M, H), lambda i: (i, 0)),     # time enc tile
                pl.BlockSpec((max_hop, H), lambda i: (0, 0)),    # pos enc (resident)
                pl.BlockSpec((H, H + 128), lambda i: (0, 0)),    # [fn_w | p_w]
                pl.BlockSpec((1, H + 128), lambda i: (0, 0)),    # [fn_b | p_b]
            ],
            out_specs=(
                pl.BlockSpec((TILE_M, H), lambda i: (i, 0)),
                pl.BlockSpec((TILE_M, 1), lambda i: (i, 0)),
                pl.BlockSpec((TILE_M, 1), lambda i: (i, 0)),
            ),
            scratch_shapes=[
                pltpu.VMEM((TILE_M, H), jnp.float32),   # evolving state
                pltpu.VMEM((TILE_M, 1), jnp.float32),   # halting probability
            ],
        ),
        compiler_params=pltpu.CompilerParams(
            dimension_semantics=("parallel",),
        ),
    )(state2d, te2d, pos2d, w_aug, b_aug)

    prev = prev2d[:M].reshape(B, S, H)
    rem = rem2d[:M, 0].reshape(B, S)
    nup = nup2d[:M, 0].reshape(B, S)
    return prev, (rem, nup)


def act_basic_reference(state, inputs, params, time_enc, pos_enc, max_hop):
    """Pure-JAX replica of the PyTorch forward (3-D branch), for verification."""
    B, S, H = inputs.shape
    hp = jnp.zeros((B, S), jnp.float32)
    rem = jnp.zeros((B, S), jnp.float32)
    nup = jnp.zeros((B, S), jnp.float32)
    prev = jnp.zeros_like(state)
    step = 0
    while bool(jnp.any((hp < THRESHOLD) & (nup < max_hop))):
        state = state + time_enc[:, :S, :]
        state = state + pos_enc[:, step, :][:, None, :]
        p = jax.nn.sigmoid(
            jnp.einsum("bsh,h->bs", state, params["p_w"][0]) + params["p_b"][0])
        still_running = (hp < 1.0).astype(jnp.float32)
        new_halted = ((hp + p * still_running) > THRESHOLD).astype(jnp.float32) * still_running
        still_running = ((hp + p * still_running) <= THRESHOLD).astype(jnp.float32) * still_running
        hp = hp + p * still_running
        rem = rem + new_halted * (1.0 - hp)
        hp = hp + new_halted * rem
        nup = nup + still_running + new_halted
        uw = p * still_running + new_halted * rem
        state = jnp.maximum(
            state.reshape(B * S, H) @ params["fn_w"] + params["fn_b"], 0.0
        ).reshape(B, S, H)
        prev = state * uw[..., None] + prev * (1.0 - uw[..., None])
        step += 1
    return prev, (rem, nup)


if __name__ == "__main__":
    B, S, H = 2, 8, 128
    max_hop = 4

    key = jax.random.PRNGKey(0)
    k1, k2, k3, k4, k5, k6, k7 = jax.random.split(key, 7)

    state = jax.random.normal(k1, (B, S, H), jnp.float32)
    inputs = jax.random.normal(k2, (B, S, H), jnp.float32)
    time_enc = 0.1 * jax.random.normal(k3, (1, S, H), jnp.float32)
    pos_enc = 0.1 * jax.random.normal(k4, (1, max_hop, H), jnp.float32)

    params = {
        # nn.Linear(hidden_size, 1): weight (1, H); bias filled with 1.0
        "p_w": 0.2 * jax.random.normal(k5, (1, H), jnp.float32),
        "p_b": jnp.ones((1,), jnp.float32),
        # TODO(synk): `fn` is an arbitrary module in the PyTorch forward(); it is
        # modelled here as a deterministic Linear+ReLU fused into the kernel.
        "fn_w": (1.0 / math.sqrt(H)) * jax.random.normal(k6, (H, H), jnp.float32),
        "fn_b": 0.05 * jax.random.normal(k7, (H,), jnp.float32),
    }

    prev, (rem, nup) = act_basic_forward(state, inputs, params, time_enc, pos_enc, max_hop)
    jax.block_until_ready((prev, rem, nup))

    prev_r, (rem_r, nup_r) = act_basic_reference(state, inputs, params, time_enc, pos_enc, max_hop)
    np.testing.assert_allclose(np.asarray(prev), np.asarray(prev_r), rtol=1e-3, atol=1e-3)
    np.testing.assert_allclose(np.asarray(rem), np.asarray(rem_r), rtol=1e-3, atol=1e-3)
    np.testing.assert_allclose(np.asarray(nup), np.asarray(nup_r), rtol=1e-3, atol=1e-3)

    print("KERNEL_OK")
</pallas_src>

<mosaic_0001>
module attributes {stable_mosaic.version = 11 : i64} {
  func.func @_act_kernel(%arg0: i32, %arg1: memref<16x128xf32, #tpu.memory_space<vmem>>, %arg2: memref<16x128xf32, #tpu.memory_space<vmem>>, %arg3: memref<4x128xf32, #tpu.memory_space<vmem>>, %arg4: memref<128x256xf32, #tpu.memory_space<vmem>>, %arg5: memref<1x256xf32, #tpu.memory_space<vmem>>, %arg6: memref<16x128xf32, #tpu.memory_space<vmem>>, %arg7: memref<16x1xf32, #tpu.memory_space<vmem>>, %arg8: memref<16x1xf32, #tpu.memory_space<vmem>>, %arg9: memref<16x128xf32, #tpu.memory_space<vmem>>, %arg10: memref<16x1xf32, #tpu.memory_space<vmem>>) attributes {dimension_semantics = [#tpu.dimension_semantics<parallel>], iteration_bounds = array<i64: 1>, scalar_prefetch = 0 : i64, scratch_operands = 2 : i64, tpu.core_type = #tpu.core_type<tc>, window_params = [{transform_indices = @transform_0, window_bounds = array<i64: 16, 128>}, {transform_indices = @transform_1, window_bounds = array<i64: 16, 128>}, {pipeline_mode = #tpu.pipeline_mode<synchronous>, transform_indices = @transform_2, window_bounds = array<i64: 4, 128>}, {pipeline_mode = #tpu.pipeline_mode<synchronous>, transform_indices = @transform_3, window_bounds = array<i64: 128, 256>}, {pipeline_mode = #tpu.pipeline_mode<synchronous>, transform_indices = @transform_4, window_bounds = array<i64: 1, 256>}, {transform_indices = @transform_5, window_bounds = array<i64: 16, 128>}, {transform_indices = @transform_6, window_bounds = array<i64: 16, 1>}, {transform_indices = @transform_7, window_bounds = array<i64: 16, 1>}]} {
    %c0 = arith.constant 0 : index
    %c0_0 = arith.constant 0 : index
    %0 = vector.load %arg1[%c0, %c0_0] : memref<16x128xf32, #tpu.memory_space<vmem>>, vector<16x128xf32>
    %c0_1 = arith.constant 0 : index
    %c0_2 = arith.constant 0 : index
    %1 = vector.load %arg9[%c0_1, %c0_2] : memref<16x128xf32, #tpu.memory_space<vmem>>, vector<16x128xf32>
    tpu.vector_store %arg9[%c0_1, %c0_2], %0 {strides = array<i32>} : memref<16x128xf32, #tpu.memory_space<vmem>>, vector<16x128xf32>,
    %cst = arith.constant 0.000000e+00 : f32
    %2 = vector.broadcast %cst : f32 to vector<16x1xf32>
    %c0_3 = arith.constant 0 : index
    %c0_4 = arith.constant 0 : index
    %3 = vector.load %arg10[%c0_3, %c0_4] : memref<16x1xf32, #tpu.memory_space<vmem>>, vector<16x1xf32>
    tpu.vector_store %arg10[%c0_3, %c0_4], %2 {strides = array<i32>} : memref<16x1xf32, #tpu.memory_space<vmem>>, vector<16x1xf32>,
    %cst_5 = arith.constant 0.000000e+00 : f32
    %4 = vector.broadcast %cst_5 : f32 to vector<16x128xf32>
    %c0_6 = arith.constant 0 : index
    %c0_7 = arith.constant 0 : index
    %5 = vector.load %arg6[%c0_6, %c0_7] : memref<16x128xf32, #tpu.memory_space<vmem>>, vector<16x128xf32>
    tpu.vector_store %arg6[%c0_6, %c0_7], %4 {strides = array<i32>} : memref<16x128xf32, #tpu.memory_space<vmem>>, vector<16x128xf32>,
    %cst_8 = arith.constant 0.000000e+00 : f32
    %6 = vector.broadcast %cst_8 : f32 to vector<16x1xf32>
    %c0_9 = arith.constant 0 : index
    %c0_10 = arith.constant 0 : index
    %7 = vector.load %arg7[%c0_9, %c0_10] : memref<16x1xf32, #tpu.memory_space<vmem>>, vector<16x1xf32>
    tpu.vector_store %arg7[%c0_9, %c0_10], %6 {strides = array<i32>} : memref<16x1xf32, #tpu.memory_space<vmem>>, vector<16x1xf32>,
    %cst_11 = arith.constant 0.000000e+00 : f32
    %8 = vector.broadcast %cst_11 : f32 to vector<16x1xf32>
    %c0_12 = arith.constant 0 : index
    %c0_13 = arith.constant 0 : index
    %9 = vector.load %arg8[%c0_12, %c0_13] : memref<16x1xf32, #tpu.memory_space<vmem>>, vector<16x1xf32>
    tpu.vector_store %arg8[%c0_12, %c0_13], %8 {strides = array<i32>} : memref<16x1xf32, #tpu.memory_space<vmem>>, vector<16x1xf32>,
    %c0_i32 = arith.constant 0 : i32
    %c0_14 = arith.constant 0 : index
    %c0_15 = arith.constant 0 : index
    %10 = vector.load %arg9[%c0_14, %c0_15] : memref<16x128xf32, #tpu.memory_space<vmem>>, vector<16x128xf32>
    %c0_16 = arith.constant 0 : index
    %c0_17 = arith.constant 0 : index
    %11 = vector.load %arg2[%c0_16, %c0_17] : memref<16x128xf32, #tpu.memory_space<vmem>>, vector<16x128xf32>
    %12 = arith.addf %10, %11 : vector<16x128xf32>
    %13 = arith.index_cast %c0_i32 : i32 to index
    %c0_18 = arith.constant 0 : index
    %14 = vector.load %arg3[%13, %c0_18] : memref<4x128xf32, #tpu.memory_space<vmem>>, vector<1x128xf32>
    %15 = vector.broadcast %14 : vector<1x128xf32> to vector<16x128xf32>
    %16 = arith.addf %12, %15 : vector<16x128xf32>
    %c0_19 = arith.constant 0 : index
    %c0_20 = arith.constant 0 : index
    %17 = vector.load %arg4[%c0_19, %c0_20] : memref<128x256xf32, #tpu.memory_space<vmem>>, vector<128x256xf32>
    %cst_21 = arith.constant dense<0.000000e+00> : vector<16x256xf32>
    %18 = tpu.matmul %16, %17, %cst_21 {dimension_numbers = #tpu.dot_dimension_numbers<[1], [0], [0], [1], [0, 0, 1, 1], [], []>} : vector<16x128xf32>, vector<128x256xf32>, vector<16x256xf32> -> vector<16x256xf32>
    %c0_22 = arith.constant 0 : index
    %c0_23 = arith.constant 0 : index
    %19 = vector.load %arg5[%c0_22, %c0_23] : memref<1x256xf32, #tpu.memory_space<vmem>>, vector<1x256xf32>
    %20 = vector.broadcast %19 : vector<1x256xf32> to vector<16x256xf32>
    %21 = arith.addf %18, %20 : vector<16x256xf32>
    %22 = vector.extract_strided_slice %21 {offsets = [0, 128], sizes = [16, 1], strides = [1, 1]} : vector<16x256xf32> to vector<16x1xf32>
    %23 = arith.negf %22 : vector<16x1xf32>
    %24 = math.exp %23 : vector<16x1xf32>
    %cst_24 = arith.constant 1.000000e+00 : f32
    %25 = vector.broadcast %cst_24 : f32 to vector<16x1xf32>
    %26 = arith.addf %25, %24 : vector<16x1xf32>
    %27 = arith.divf %25, %26 : vector<16x1xf32>
    %28 = vector.extract_strided_slice %21 {offsets = [0, 0], sizes = [16, 128], strides = [1, 1]} : vector<16x256xf32> to vector<16x128xf32>
    %cst_25 = arith.constant 0.000000e+00 : f32
    %29 = vector.broadcast %cst_25 : f32 to vector<16x128xf32>
    %30 = arith.maximumf %28, %29 : vector<16x128xf32>
    %c0_26 = arith.constant 0 : index
    %c0_27 = arith.constant 0 : index
    %31 = vector.load %arg10[%c0_26, %c0_27] : memref<16x1xf32, #tpu.memory_space<vmem>>, vector<16x1xf32>
    %c0_28 = arith.constant 0 : index
    %c0_29 = arith.constant 0 : index
    %32 = vector.load %arg7[%c0_28, %c0_29] : memref<16x1xf32, #tpu.memory_space<vmem>>, vector<16x1xf32>
    %c0_30 = arith.constant 0 : index
    %c0_31 = arith.constant 0 : index
    %33 = vector.load %arg8[%c0_30, %c0_31] : memref<16x1xf32, #tpu.memory_space<vmem>>, vector<16x1xf32>
    %cst_32 = arith.constant 1.000000e+00 : f32
    %34 = vector.broadcast %cst_32 : f32 to vector<16x1xf32>
    %35 = arith.cmpf olt, %31, %34 : vector<16x1xf32>
    %cst_33 = arith.constant 1.000000e+00 : f32
    %cst_34 = arith.constant 0.000000e+00 : f32
    %36 = vector.broadcast %cst_33 : f32 to vector<16x1xf32>
    %37 = vector.broadcast %cst_34 : f32 to vector<16x1xf32>
    %38 = arith.select %35, %36, %37 : vector<16x1xi1>, vector<16x1xf32>
    %39 = arith.mulf %27, %38 : vector<16x1xf32>
    %40 = arith.addf %31, %39 : vector<16x1xf32>
    %cst_35 = arith.constant 0.899999976 : f32
    %41 = vector.broadcast %cst_35 : f32 to vector<16x1xf32>
    %42 = arith.cmpf ogt, %40, %41 : vector<16x1xf32>
    %cst_36 = arith.constant 0.000000e+00 : f32
    %43 = vector.broadcast %cst_36 : f32 to vector<16x1xf32>
    %44 = arith.select %42, %38, %43 : vector<16x1xi1>, vector<16x1xf32>
    %cst_37 = arith.constant 0.899999976 : f32
    %45 = vector.broadcast %cst_37 : f32 to vector<16x1xf32>
    %46 = arith.cmpf ole, %40, %45 : vector<16x1xf32>
    %cst_38 = arith.constant 0.000000e+00 : f32
    %47 = vector.broadcast %cst_38 : f32 to vector<16x1xf32>
    %48 = arith.select %46, %38, %47 : vector<16x1xi1>, vector<16x1xf32>
    %49 = arith.mulf %27, %48 : vector<16x1xf32>
    %50 = arith.addf %31, %49 : vector<16x1xf32>
    %cst_39 = arith.constant 1.000000e+00 : f32
    %51 = vector.broadcast %cst_39 : f32 to vector<16x1xf32>
    %52 = arith.subf %51, %50 : vector<16x1xf32>
    %53 = arith.mulf %44, %52 : vector<16x1xf32>
    %54 = arith.addf %32, %53 : vector<16x1xf32>
    %55 = arith.mulf %44, %54 : vector<16x1xf32>
    %56 = arith.addf %50, %55 : vector<16x1xf32>
    %57 = arith.addf %33, %48 : vector<16x1xf32>
    %58 = arith.addf %57, %44 : vector<16x1xf32>
    %59 = arith.mulf %27, %48 : vector<16x1xf32>
    %60 = arith.mulf %44, %54 : vector<16x1xf32>
    %61 = arith.addf %59, %60 : vector<16x1xf32>
    %62 = vector.broadcast %61 : vector<16x1xf32> to vector<16x128xf32>
    %63 = arith.mulf %30, %62 : vector<16x128xf32>
    %c0_40 = arith.constant 0 : index
    %c0_41 = arith.constant 0 : index
    %64 = vector.load %arg6[%c0_40, %c0_41] : memref<16x128xf32, #tpu.memory_space<vmem>>, vector<16x128xf32>
    %cst_42 = arith.constant 1.000000e+00 : f32
    %65 = vector.broadcast %cst_42 : f32 to vector<16x1xf32>
    %66 = arith.subf %65, %61 : vector<16x1xf32>
    %67 = vector.broadcast %66 : vector<16x1xf32> to vector<16x128xf32>
    %68 = arith.mulf %64, %67 : vector<16x128xf32>
    %69 = arith.addf %63, %68 : vector<16x128xf32>
    %c0_43 = arith.constant 0 : index
    %c0_44 = arith.constant 0 : index
    %70 = vector.load %arg6[%c0_43, %c0_44] : memref<16x128xf32, #tpu.memory_space<vmem>>, vector<16x128xf32>
    tpu.vector_store %arg6[%c0_43, %c0_44], %69 {strides = array<i32>} : memref<16x128xf32, #tpu.memory_space<vmem>>, vector<16x128xf32>,
    %c0_45 = arith.constant 0 : index
    %c0_46 = arith.constant 0 : index
    %71 = vector.load %arg9[%c0_45, %c0_46] : memref<16x128xf32, #tpu.memory_space<vmem>>, vector<16x128xf32>
    tpu.vector_store %arg9[%c0_45, %c0_46], %30 {strides = array<i32>} : memref<16x128xf32, #tpu.memory_space<vmem>>, vector<16x128xf32>,
    %c0_47 = arith.constant 0 : index
    %c0_48 = arith.constant 0 : index
    %72 = vector.load %arg10[%c0_47, %c0_48] : memref<16x1xf32, #tpu.memory_space<vmem>>, vector<16x1xf32>
    tpu.vector_store %arg10[%c0_47, %c0_48], %56 {strides = array<i32>} : memref<16x1xf32, #tpu.memory_space<vmem>>, vector<16x1xf32>,
    %c0_49 = arith.constant 0 : index
    %c0_50 = arith.constant 0 : index
    %73 = vector.load %arg7[%c0_49, %c0_50] : memref<16x1xf32, #tpu.memory_space<vmem>>, vector<16x1xf32>
    tpu.vector_store %arg7[%c0_49, %c0_50], %54 {strides = array<i32>} : memref<16x1xf32, #tpu.memory_space<vmem>>, vector<16x1xf32>,
    %c0_51 = arith.constant 0 : index
    %c0_52 = arith.constant 0 : index
    %74 = vector.load %arg8[%c0_51, %c0_52] : memref<16x1xf32, #tpu.memory_space<vmem>>, vector<16x1xf32>
    tpu.vector_store %arg8[%c0_51, %c0_52], %58 {strides = array<i32>} : memref<16x1xf32, #tpu.memory_space<vmem>>, vector<16x1xf32>,
    %c1_i32 = arith.constant 1 : i32
    %c0_53 = arith.constant 0 : index
    %c0_54 = arith.constant 0 : index
    %75 = vector.load %arg9[%c0_53, %c0_54] : memref<16x128xf32, #tpu.memory_space<vmem>>, vector<16x128xf32>
    %c0_55 = arith.constant 0 : index
    %c0_56 = arith.constant 0 : index
    %76 = vector.load %arg2[%c0_55, %c0_56] : memref<16x128xf32, #tpu.memory_space<vmem>>, vector<16x128xf32>
    %77 = arith.addf %75, %76 : vector<16x128xf32>
    %78 = arith.index_cast %c1_i32 : i32 to index
    %c0_57 = arith.constant 0 : index
    %79 = vector.load %arg3[%78, %c0_57] : memref<4x128xf32, #tpu.memory_space<vmem>>, vector<1x128xf32>
    %80 = vector.broadcast %79 : vector<1x128xf32> to vector<16x128xf32>
    %81 = arith.addf %77, %80 : vector<16x128xf32>
    %c0_58 = arith.constant 0 : index
    %c0_59 = arith.constant 0 : index
    %82 = vector.load %arg4[%c0_58, %c0_59] : memref<128x256xf32, #tpu.memory_space<vmem>>, vector<128x256xf32>
    %cst_60 = arith.constant dense<0.000000e+00> : vector<16x256xf32>
    %83 = tpu.matmul %81, %82, %cst_60 {dimension_numbers = #tpu.dot_dimension_numbers<[1], [0], [0], [1], [0, 0, 1, 1], [], []>} : vector<16x128xf32>, vector<128x256xf32>, vector<16x256xf32> -> vector<16x256xf32>
    %c0_61 = arith.constant 0 : index
    %c0_62 = arith.constant 0 : index
    %84 = vector.load %arg5[%c0_61, %c0_62] : memref<1x256xf32, #tpu.memory_space<vmem>>, vector<1x256xf32>
    %85 = vector.broadcast %84 : vector<1x256xf32> to vector<16x256xf32>
    %86 = arith.addf %83, %85 : vector<16x256xf32>
    %87 = vector.extract_strided_slice %86 {offsets = [0, 128], sizes = [16, 1], strides = [1, 1]} : vector<16x256xf32> to vector<16x1xf32>
    %88 = arith.negf %87 : vector<16x1xf32>
    %89 = math.exp %88 : vector<16x1xf32>
    %cst_63 = arith.constant 1.000000e+00 : f32
    %90 = vector.broadcast %cst_63 : f32 to vector<16x1xf32>
    %91 = arith.addf %90, %89 : vector<16x1xf32>
    %92 = arith.divf %90, %91 : vector<16x1xf32>
    %93 = vector.extract_strided_slice %86 {offsets = [0, 0], sizes = [16, 128], strides = [1, 1]} : vector<16x256xf32> to vector<16x128xf32>
    %cst_64 = arith.constant 0.000000e+00 : f32
    %94 = vector.broadcast %cst_64 : f32 to vector<16x128xf32>
    %95 = arith.maximumf %93, %94 : vector<16x128xf32>
    %c0_65 = arith.constant 0 : index
    %c0_66 = arith.constant 0 : index
    %96 = vector.load %arg10[%c0_65, %c0_66] : memref<16x1xf32, #tpu.memory_space<vmem>>, vector<16x1xf32>
    %c0_67 = arith.constant 0 : index
    %c0_68 = arith.constant 0 : index
    %97 = vector.load %arg7[%c0_67, %c0_68] : memref<16x1xf32, #tpu.memory_space<vmem>>, vector<16x1xf32>
    %c0_69 = arith.constant 0 : index
    %c0_70 = arith.constant 0 : index
    %98 = vector.load %arg8[%c0_69, %c0_70] : memref<16x1xf32, #tpu.memory_space<vmem>>, vector<16x1xf32>
    %cst_71 = arith.constant 1.000000e+00 : f32
    %99 = vector.broadcast %cst_71 : f32 to vector<16x1xf32>
    %100 = arith.cmpf olt, %96, %99 : vector<16x1xf32>
    %cst_72 = arith.constant 1.000000e+00 : f32
    %cst_73 = arith.constant 0.000000e+00 : f32
    %101 = vector.broadcast %cst_72 : f32 to vector<16x1xf32>
    %102 = vector.broadcast %cst_73 : f32 to vector<16x1xf32>
    %103 = arith.select %100, %101, %102 : vector<16x1xi1>, vector<16x1xf32>
    %104 = arith.mulf %92, %103 : vector<16x1xf32>
    %105 = arith.addf %96, %104 : vector<16x1xf32>
    %cst_74 = arith.constant 0.899999976 : f32
    %106 = vector.broadcast %cst_74 : f32 to vector<16x1xf32>
    %107 = arith.cmpf ogt, %105, %106 : vector<16x1xf32>
    %cst_75 = arith.constant 0.000000e+00 : f32
    %108 = vector.broadcast %cst_75 : f32 to vector<16x1xf32>
    %109 = arith.select %107, %103, %108 : vector<16x1xi1>, vector<16x1xf32>
    %cst_76 = arith.constant 0.899999976 : f32
    %110 = vector.broadcast %cst_76 : f32 to vector<16x1xf32>
    %111 = arith.cmpf ole, %105, %110 : vector<16x1xf32>
    %cst_77 = arith.constant 0.000000e+00 : f32
    %112 = vector.broadcast %cst_77 : f32 to vector<16x1xf32>
    %113 = arith.select %111, %103, %112 : vector<16x1xi1>, vector<16x1xf32>
    %114 = arith.mulf %92, %113 : vector<16x1xf32>
    %115 = arith.addf %96, %114 : vector<16x1xf32>
    %cst_78 = arith.constant 1.000000e+00 : f32
    %116 = vector.broadcast %cst_78 : f32 to vector<16x1xf32>
    %117 = arith.subf %116, %115 : vector<16x1xf32>
    %118 = arith.mulf %109, %117 : vector<16x1xf32>
    %119 = arith.addf %97, %118 : vector<16x1xf32>
    %120 = arith.mulf %109, %119 : vector<16x1xf32>
    %121 = arith.addf %115, %120 : vector<16x1xf32>
    %122 = arith.addf %98, %113 : vector<16x1xf32>
    %123 = arith.addf %122, %109 : vector<16x1xf32>
    %124 = arith.mulf %92, %113 : vector<16x1xf32>
    %125 = arith.mulf %109, %119 : vector<16x1xf32>
    %126 = arith.addf %124, %125 : vector<16x1xf32>
    %127 = vector.broadcast %126 : vector<16x1xf32> to vector<16x128xf32>
    %128 = arith.mulf %95, %127 : vector<16x128xf32>
    %c0_79 = arith.constant 0 : index
    %c0_80 = arith.constant 0 : index
    %129 = vector.load %arg6[%c0_79, %c0_80] : memref<16x128xf32, #tpu.memory_space<vmem>>, vector<16x128xf32>
    %cst_81 = arith.constant 1.000000e+00 : f32
    %130 = vector.broadcast %cst_81 : f32 to vector<16x1xf32>
    %131 = arith.subf %130, %126 : vector<16x1xf32>
    %132 = vector.broadcast %131 : vector<16x1xf32> to vector<16x128xf32>
    %133 = arith.mulf %129, %132 : vector<16x128xf32>
    %134 = arith.addf %128, %133 : vector<16x128xf32>
    %c0_82 = arith.constant 0 : index
    %c0_83 = arith.constant 0 : index
    %135 = vector.load %arg6[%c0_82, %c0_83] : memref<16x128xf32, #tpu.memory_space<vmem>>, vector<16x128xf32>
    tpu.vector_store %arg6[%c0_82, %c0_83], %134 {strides = array<i32>} : memref<16x128xf32, #tpu.memory_space<vmem>>, vector<16x128xf32>,
    %c0_84 = arith.constant 0 : index
    %c0_85 = arith.constant 0 : index
    %136 = vector.load %arg9[%c0_84, %c0_85] : memref<16x128xf32, #tpu.memory_space<vmem>>, vector<16x128xf32>
    tpu.vector_store %arg9[%c0_84, %c0_85], %95 {strides = array<i32>} : memref<16x128xf32, #tpu.memory_space<vmem>>, vector<16x128xf32>,
    %c0_86 = arith.constant 0 : index
    %c0_87 = arith.constant 0 : index
    %137 = vector.load %arg10[%c0_86, %c0_87] : memref<16x1xf32, #tpu.memory_space<vmem>>, vector<16x1xf32>
    tpu.vector_store %arg10[%c0_86, %c0_87], %121 {strides = array<i32>} : memref<16x1xf32, #tpu.memory_space<vmem>>, vector<16x1xf32>,
    %c0_88 = arith.constant 0 : index
    %c0_89 = arith.constant 0 : index
    %138 = vector.load %arg7[%c0_88, %c0_89] : memref<16x1xf32, #tpu.memory_space<vmem>>, vector<16x1xf32>
    tpu.vector_store %arg7[%c0_88, %c0_89], %119 {strides = array<i32>} : memref<16x1xf32, #tpu.memory_space<vmem>>, vector<16x1xf32>,
    %c0_90 = arith.constant 0 : index
    %c0_91 = arith.constant 0 : index
    %139 = vector.load %arg8[%c0_90, %c0_91] : memref<16x1xf32, #tpu.memory_space<vmem>>, vector<16x1xf32>
    tpu.vector_store %arg8[%c0_90, %c0_91], %123 {strides = array<i32>} : memref<16x1xf32, #tpu.memory_space<vmem>>, vector<16x1xf32>,
    %c2_i32 = arith.constant 2 : i32
    %c0_92 = arith.constant 0 : index
    %c0_93 = arith.constant 0 : index
    %140 = vector.load %arg9[%c0_92, %c0_93] : memref<16x128xf32, #tpu.memory_space<vmem>>, vector<16x128xf32>
    %c0_94 = arith.constant 0 : index
    %c0_95 = arith.constant 0 : index
    %141 = vector.load %arg2[%c0_94, %c0_95] : memref<16x128xf32, #tpu.memory_space<vmem>>, vector<16x128xf32>
    %142 = arith.addf %140, %141 : vector<16x128xf32>
    %143 = arith.index_cast %c2_i32 : i32 to index
    %c0_96 = arith.constant 0 : index
    %144 = vector.load %arg3[%143, %c0_96] : memref<4x128xf32, #tpu.memory_space<vmem>>, vector<1x128xf32>
    %145 = vector.broadcast %144 : vector<1x128xf32> to vector<16x128xf32>
    %146 = arith.addf %142, %145 : vector<16x128xf32>
    %c0_97 = arith.constant 0 : index
    %c0_98 = arith.constant 0 : index
    %147 = vector.load %arg4[%c0_97, %c0_98] : memref<128x256xf32, #tpu.memory_space<vmem>>, vector<128x256xf32>
    %cst_99 = arith.constant dense<0.000000e+00> : vector<16x256xf32>
    %148 = tpu.matmul %146, %147, %cst_99 {dimension_numbers = #tpu.dot_dimension_numbers<[1], [0], [0], [1], [0, 0, 1, 1], [], []>} : vector<16x128xf32>, vector<128x256xf32>, vector<16x256xf32> -> vector<16x256xf32>
    %c0_100 = arith.constant 0 : index
    %c0_101 = arith.constant 0 : index
    %149 = vector.load %arg5[%c0_100, %c0_101] : memref<1x256xf32, #tpu.memory_space<vmem>>, vector<1x256xf32>
    %150 = vector.broadcast %149 : vector<1x256xf32> to vector<16x256xf32>
    %151 = arith.addf %148, %150 : vector<16x256xf32>
    %152 = vector.extract_strided_slice %151 {offsets = [0, 128], sizes = [16, 1], strides = [1, 1]} : vector<16x256xf32> to vector<16x1xf32>
    %153 = arith.negf %152 : vector<16x1xf32>
    %154 = math.exp %153 : vector<16x1xf32>
    %cst_102 = arith.constant 1.000000e+00 : f32
    %155 = vector.broadcast %cst_102 : f32 to vector<16x1xf32>
    %156 = arith.addf %155, %154 : vector<16x1xf32>
    %157 = arith.divf %155, %156 : vector<16x1xf32>
    %158 = vector.extract_strided_slice %151 {offsets = [0, 0], sizes = [16, 128], strides = [1, 1]} : vector<16x256xf32> to vector<16x128xf32>
    %cst_103 = arith.constant 0.000000e+00 : f32
    %159 = vector.broadcast %cst_103 : f32 to vector<16x128xf32>
    %160 = arith.maximumf %158, %159 : vector<16x128xf32>
    %c0_104 = arith.constant 0 : index
    %c0_105 = arith.constant 0 : index
    %161 = vector.load %arg10[%c0_104, %c0_105] : memref<16x1xf32, #tpu.memory_space<vmem>>, vector<16x1xf32>
    %c0_106 = arith.constant 0 : index
    %c0_107 = arith.constant 0 : index
    %162 = vector.load %arg7[%c0_106, %c0_107] : memref<16x1xf32, #tpu.memory_space<vmem>>, vector<16x1xf32>
    %c0_108 = arith.constant 0 : index
    %c0_109 = arith.constant 0 : index
    %163 = vector.load %arg8[%c0_108, %c0_109] : memref<16x1xf32, #tpu.memory_space<vmem>>, vector<16x1xf32>
    %cst_110 = arith.constant 1.000000e+00 : f32
    %164 = vector.broadcast %cst_110 : f32 to vector<16x1xf32>
    %165 = arith.cmpf olt, %161, %164 : vector<16x1xf32>
    %cst_111 = arith.constant 1.000000e+00 : f32
    %cst_112 = arith.constant 0.000000e+00 : f32
    %166 = vector.broadcast %cst_111 : f32 to vector<16x1xf32>
    %167 = vector.broadcast %cst_112 : f32 to vector<16x1xf32>
    %168 = arith.select %165, %166, %167 : vector<16x1xi1>, vector<16x1xf32>
    %169 = arith.mulf %157, %168 : vector<16x1xf32>
    %170 = arith.addf %161, %169 : vector<16x1xf32>
    %cst_113 = arith.constant 0.899999976 : f32
    %171 = vector.broadcast %cst_113 : f32 to vector<16x1xf32>
    %172 = arith.cmpf ogt, %170, %171 : vector<16x1xf32>
    %cst_114 = arith.constant 0.000000e+00 : f32
    %173 = vector.broadcast %cst_114 : f32 to vector<16x1xf32>
    %174 = arith.select %172, %168, %173 : vector<16x1xi1>, vector<16x1xf32>
    %cst_115 = arith.constant 0.899999976 : f32
    %175 = vector.broadcast %cst_115 : f32 to vector<16x1xf32>
    %176 = arith.cmpf ole, %170, %175 : vector<16x1xf32>
    %cst_116 = arith.constant 0.000000e+00 : f32
    %177 = vector.broadcast %cst_116 : f32 to vector<16x1xf32>
    %178 = arith.select %176, %168, %177 : vector<16x1xi1>, vector<16x1xf32>
    %179 = arith.mulf %157, %178 : vector<16x1xf32>
    %180 = arith.addf %161, %179 : vector<16x1xf32>
    %cst_117 = arith.constant 1.000000e+00 : f32
    %181 = vector.broadcast %cst_117 : f32 to vector<16x1xf32>
    %182 = arith.subf %181, %180 : vector<16x1xf32>
    %183 = arith.mulf %174, %182 : vector<16x1xf32>
    %184 = arith.addf %162, %183 : vector<16x1xf32>
    %185 = arith.mulf %174, %184 : vector<16x1xf32>
    %186 = arith.addf %180, %185 : vector<16x1xf32>
    %187 = arith.addf %163, %178 : vector<16x1xf32>
    %188 = arith.addf %187, %174 : vector<16x1xf32>
    %189 = arith.mulf %157, %178 : vector<16x1xf32>
    %190 = arith.mulf %174, %184 : vector<16x1xf32>
    %191 = arith.addf %189, %190 : vector<16x1xf32>
    %192 = vector.broadcast %191 : vector<16x1xf32> to vector<16x128xf32>
    %193 = arith.mulf %160, %192 : vector<16x128xf32>
    %c0_118 = arith.constant 0 : index
    %c0_119 = arith.constant 0 : index
    %194 = vector.load %arg6[%c0_118, %c0_119] : memref<16x128xf32, #tpu.memory_space<vmem>>, vector<16x128xf32>
    %cst_120 = arith.constant 1.000000e+00 : f32
    %195 = vector.broadcast %cst_120 : f32 to vector<16x1xf32>
    %196 = arith.subf %195, %191 : vector<16x1xf32>
    %197 = vector.broadcast %196 : vector<16x1xf32> to vector<16x128xf32>
    %198 = arith.mulf %194, %197 : vector<16x128xf32>
    %199 = arith.addf %193, %198 : vector<16x128xf32>
    %c0_121 = arith.constant 0 : index
    %c0_122 = arith.constant 0 : index
    %200 = vector.load %arg6[%c0_121, %c0_122] : memref<16x128xf32, #tpu.memory_space<vmem>>, vector<16x128xf32>
    tpu.vector_store %arg6[%c0_121, %c0_122], %199 {strides = array<i32>} : memref<16x128xf32, #tpu.memory_space<vmem>>, vector<16x128xf32>,
    %c0_123 = arith.constant 0 : index
    %c0_124 = arith.constant 0 : index
    %201 = vector.load %arg9[%c0_123, %c0_124] : memref<16x128xf32, #tpu.memory_space<vmem>>, vector<16x128xf32>
    tpu.vector_store %arg9[%c0_123, %c0_124], %160 {strides = array<i32>} : memref<16x128xf32, #tpu.memory_space<vmem>>, vector<16x128xf32>,
    %c0_125 = arith.constant 0 : index
    %c0_126 = arith.constant 0 : index
    %202 = vector.load %arg10[%c0_125, %c0_126] : memref<16x1xf32, #tpu.memory_space<vmem>>, vector<16x1xf32>
    tpu.vector_store %arg10[%c0_125, %c0_126], %186 {strides = array<i32>} : memref<16x1xf32, #tpu.memory_space<vmem>>, vector<16x1xf32>,
    %c0_127 = arith.constant 0 : index
    %c0_128 = arith.constant 0 : index
    %203 = vector.load %arg7[%c0_127, %c0_128] : memref<16x1xf32, #tpu.memory_space<vmem>>, vector<16x1xf32>
    tpu.vector_store %arg7[%c0_127, %c0_128], %184 {strides = array<i32>} : memref<16x1xf32, #tpu.memory_space<vmem>>, vector<16x1xf32>,
    %c0_129 = arith.constant 0 : index
    %c0_130 = arith.constant 0 : index
    %204 = vector.load %arg8[%c0_129, %c0_130] : memref<16x1xf32, #tpu.memory_space<vmem>>, vector<16x1xf32>
    tpu.vector_store %arg8[%c0_129, %c0_130], %188 {strides = array<i32>} : memref<16x1xf32, #tpu.memory_space<vmem>>, vector<16x1xf32>,
    %c3_i32 = arith.constant 3 : i32
    %c0_131 = arith.constant 0 : index
    %c0_132 = arith.constant 0 : index
    %205 = vector.load %arg9[%c0_131, %c0_132] : memref<16x128xf32, #tpu.memory_space<vmem>>, vector<16x128xf32>
    %c0_133 = arith.constant 0 : index
    %c0_134 = arith.constant 0 : index
    %206 = vector.load %arg2[%c0_133, %c0_134] : memref<16x128xf32, #tpu.memory_space<vmem>>, vector<16x128xf32>
    %207 = arith.addf %205, %206 : vector<16x128xf32>
    %208 = arith.index_cast %c3_i32 : i32 to index
    %c0_135 = arith.constant 0 : index
    %209 = vector.load %arg3[%208, %c0_135] : memref<4x128xf32, #tpu.memory_space<vmem>>, vector<1x128xf32>
    %210 = vector.broadcast %209 : vector<1x128xf32> to vector<16x128xf32>
    %211 = arith.addf %207, %210 : vector<16x128xf32>
    %c0_136 = arith.constant 0 : index
    %c0_137 = arith.constant 0 : index
    %212 = vector.load %arg4[%c0_136, %c0_137] : memref<128x256xf32, #tpu.memory_space<vmem>>, vector<128x256xf32>
    %cst_138 = arith.constant dense<0.000000e+00> : vector<16x256xf32>
    %213 = tpu.matmul %211, %212, %cst_138 {dimension_numbers = #tpu.dot_dimension_numbers<[1], [0], [0], [1], [0, 0, 1, 1], [], []>} : vector<16x128xf32>, vector<128x256xf32>, vector<16x256xf32> -> vector<16x256xf32>
    %c0_139 = arith.constant 0 : index
    %c0_140 = arith.constant 0 : index
    %214 = vector.load %arg5[%c0_139, %c0_140] : memref<1x256xf32, #tpu.memory_space<vmem>>, vector<1x256xf32>
    %215 = vector.broadcast %214 : vector<1x256xf32> to vector<16x256xf32>
    %216 = arith.addf %213, %215 : vector<16x256xf32>
    %217 = vector.extract_strided_slice %216 {offsets = [0, 128], sizes = [16, 1], strides = [1, 1]} : vector<16x256xf32> to vector<16x1xf32>
    %218 = arith.negf %217 : vector<16x1xf32>
    %219 = math.exp %218 : vector<16x1xf32>
    %cst_141 = arith.constant 1.000000e+00 : f32
    %220 = vector.broadcast %cst_141 : f32 to vector<16x1xf32>
    %221 = arith.addf %220, %219 : vector<16x1xf32>
    %222 = arith.divf %220, %221 : vector<16x1xf32>
    %223 = vector.extract_strided_slice %216 {offsets = [0, 0], sizes = [16, 128], strides = [1, 1]} : vector<16x256xf32> to vector<16x128xf32>
    %cst_142 = arith.constant 0.000000e+00 : f32
    %224 = vector.broadcast %cst_142 : f32 to vector<16x128xf32>
    %225 = arith.maximumf %223, %224 : vector<16x128xf32>
    %c0_143 = arith.constant 0 : index
    %c0_144 = arith.constant 0 : index
    %226 = vector.load %arg10[%c0_143, %c0_144] : memref<16x1xf32, #tpu.memory_space<vmem>>, vector<16x1xf32>
    %c0_145 = arith.constant 0 : index
    %c0_146 = arith.constant 0 : index
    %227 = vector.load %arg7[%c0_145, %c0_146] : memref<16x1xf32, #tpu.memory_space<vmem>>, vector<16x1xf32>
    %c0_147 = arith.constant 0 : index
    %c0_148 = arith.constant 0 : index
    %228 = vector.load %arg8[%c0_147, %c0_148] : memref<16x1xf32, #tpu.memory_space<vmem>>, vector<16x1xf32>
    %cst_149 = arith.constant 1.000000e+00 : f32
    %229 = vector.broadcast %cst_149 : f32 to vector<16x1xf32>
    %230 = arith.cmpf olt, %226, %229 : vector<16x1xf32>
    %cst_150 = arith.constant 1.000000e+00 : f32
    %cst_151 = arith.constant 0.000000e+00 : f32
    %231 = vector.broadcast %cst_150 : f32 to vector<16x1xf32>
    %232 = vector.broadcast %cst_151 : f32 to vector<16x1xf32>
    %233 = arith.select %230, %231, %232 : vector<16x1xi1>, vector<16x1xf32>
    %234 = arith.mulf %222, %233 : vector<16x1xf32>
    %235 = arith.addf %226, %234 : vector<16x1xf32>
    %cst_152 = arith.constant 0.899999976 : f32
    %236 = vector.broadcast %cst_152 : f32 to vector<16x1xf32>
    %237 = arith.cmpf ogt, %235, %236 : vector<16x1xf32>
    %cst_153 = arith.constant 0.000000e+00 : f32
    %238 = vector.broadcast %cst_153 : f32 to vector<16x1xf32>
    %239 = arith.select %237, %233, %238 : vector<16x1xi1>, vector<16x1xf32>
    %cst_154 = arith.constant 0.899999976 : f32
    %240 = vector.broadcast %cst_154 : f32 to vector<16x1xf32>
    %241 = arith.cmpf ole, %235, %240 : vector<16x1xf32>
    %cst_155 = arith.constant 0.000000e+00 : f32
    %242 = vector.broadcast %cst_155 : f32 to vector<16x1xf32>
    %243 = arith.select %241, %233, %242 : vector<16x1xi1>, vector<16x1xf32>
    %244 = arith.mulf %222, %243 : vector<16x1xf32>
    %245 = arith.addf %226, %244 : vector<16x1xf32>
    %cst_156 = arith.constant 1.000000e+00 : f32
    %246 = vector.broadcast %cst_156 : f32 to vector<16x1xf32>
    %247 = arith.subf %246, %245 : vector<16x1xf32>
    %248 = arith.mulf %239, %247 : vector<16x1xf32>
    %249 = arith.addf %227, %248 : vector<16x1xf32>
    %250 = arith.mulf %239, %249 : vector<16x1xf32>
    %251 = arith.addf %245, %250 : vector<16x1xf32>
    %252 = arith.addf %228, %243 : vector<16x1xf32>
    %253 = arith.addf %252, %239 : vector<16x1xf32>
    %254 = arith.mulf %222, %243 : vector<16x1xf32>
    %255 = arith.mulf %239, %249 : vector<16x1xf32>
    %256 = arith.addf %254, %255 : vector<16x1xf32>
    %257 = vector.broadcast %256 : vector<16x1xf32> to vector<16x128xf32>
    %258 = arith.mulf %225, %257 : vector<16x128xf32>
    %c0_157 = arith.constant 0 : index
    %c0_158 = arith.constant 0 : index
    %259 = vector.load %arg6[%c0_157, %c0_158] : memref<16x128xf32, #tpu.memory_space<vmem>>, vector<16x128xf32>
    %cst_159 = arith.constant 1.000000e+00 : f32
    %260 = vector.broadcast %cst_159 : f32 to vector<16x1xf32>
    %261 = arith.subf %260, %256 : vector<16x1xf32>
    %262 = vector.broadcast %261 : vector<16x1xf32> to vector<16x128xf32>
    %263 = arith.mulf %259, %262 : vector<16x128xf32>
    %264 = arith.addf %258, %263 : vector<16x128xf32>
    %c0_160 = arith.constant 0 : index
    %c0_161 = arith.constant 0 : index
    %265 = vector.load %arg6[%c0_160, %c0_161] : memref<16x128xf32, #tpu.memory_space<vmem>>, vector<16x128xf32>
    tpu.vector_store %arg6[%c0_160, %c0_161], %264 {strides = array<i32>} : memref<16x128xf32, #tpu.memory_space<vmem>>, vector<16x128xf32>,
    %c0_162 = arith.constant 0 : index
    %c0_163 = arith.constant 0 : index
    %266 = vector.load %arg9[%c0_162, %c0_163] : memref<16x128xf32, #tpu.memory_space<vmem>>, vector<16x128xf32>
    tpu.vector_store %arg9[%c0_162, %c0_163], %225 {strides = array<i32>} : memref<16x128xf32, #tpu.memory_space<vmem>>, vector<16x128xf32>,
    %c0_164 = arith.constant 0 : index
    %c0_165 = arith.constant 0 : index
    %267 = vector.load %arg10[%c0_164, %c0_165] : memref<16x1xf32, #tpu.memory_space<vmem>>, vector<16x1xf32>
    tpu.vector_store %arg10[%c0_164, %c0_165], %251 {strides = array<i32>} : memref<16x1xf32, #tpu.memory_space<vmem>>, vector<16x1xf32>,
    %c0_166 = arith.constant 0 : index
    %c0_167 = arith.constant 0 : index
    %268 = vector.load %arg7[%c0_166, %c0_167] : memref<16x1xf32, #tpu.memory_space<vmem>>, vector<16x1xf32>
    tpu.vector_store %arg7[%c0_166, %c0_167], %249 {strides = array<i32>} : memref<16x1xf32, #tpu.memory_space<vmem>>, vector<16x1xf32>,
    %c0_168 = arith.constant 0 : index
    %c0_169 = arith.constant 0 : index
    %269 = vector.load %arg8[%c0_168, %c0_169] : memref<16x1xf32, #tpu.memory_space<vmem>>, vector<16x1xf32>
    tpu.vector_store %arg8[%c0_168, %c0_169], %253 {strides = array<i32>} : memref<16x1xf32, #tpu.memory_space<vmem>>, vector<16x1xf32>,
    %c4_i32 = arith.constant 4 : i32
    return
  }
  func.func @transform_0(%arg0: i32) -> (i32, i32) {
    %c0_i32 = arith.constant 0 : i32
    %c0_i32_0 = arith.constant 0 : i32
    return %arg0, %c0_i32 : i32, i32
  }
  func.func @transform_1(%arg0: i32) -> (i32, i32) {
    %c0_i32 = arith.constant 0 : i32
    %c0_i32_0 = arith.constant 0 : i32
    return %arg0, %c0_i32 : i32, i32
  }
  func.func @transform_2(%arg0: i32) -> (i32, i32) {
    %c0_i32 = arith.constant 0 : i32
    %c0_i32_0 = arith.constant 0 : i32
    %c0_i32_1 = arith.constant 0 : i32
    return %c0_i32, %c0_i32_0 : i32, i32
  }
  func.func @transform_3(%arg0: i32) -> (i32, i32) {
    %c0_i32 = arith.constant 0 : i32
    %c0_i32_0 = arith.constant 0 : i32
    %c0_i32_1 = arith.constant 0 : i32
    return %c0_i32, %c0_i32_0 : i32, i32
  }
  func.func @transform_4(%arg0: i32) -> (i32, i32) {
    %c0_i32 = arith.constant 0 : i32
    %c0_i32_0 = arith.constant 0 : i32
    %c0_i32_1 = arith.constant 0 : i32
    return %c0_i32, %c0_i32_0 : i32, i32
  }
  func.func @transform_5(%arg0: i32) -> (i32, i32) {
    %c0_i32 = arith.constant 0 : i32
    %c0_i32_0 = arith.constant 0 : i32
    return %arg0, %c0_i32 : i32, i32
  }
  func.func @transform_6(%arg0: i32) -> (i32, i32) {
    %c0_i32 = arith.constant 0 : i32
    %c0_i32_0 = arith.constant 0 : i32
    return %arg0, %c0_i32 : i32, i32
  }
  func.func @transform_7(%arg0: i32) -> (i32, i32) {
    %c0_i32 = arith.constant 0 : i32
    %c0_i32_0 = arith.constant 0 : i32
    return %arg0, %c0_i32 : i32, i32
  }
}

</mosaic_0001>

<llo_original>
// kernel: tpu_custom_call.1
$region0: #{tpu_custom_call.1}
  #allocation0 [shape = 'u32[]', space=smem, size = 0x4, offset = 0x4, fixed_abs, tag = 'smem constant byte address 0x4 - core index']
  #allocation1 [shape = 'u32[144,128]{1,0:T(1,128)}', space=vmem, size = 0x12000, scoped, tag = 'internal scratch']
  #allocation2 [shape = 'f32[16,128]{1,0:T(8,128)}', space=vmem, size = 0x2000, scoped, tag = 'scratch operand']
  #allocation3 [shape = 'f32[16,1]{1,0:T(8,128)}', space=vmem, size = 0x2000, scoped, tag = 'scratch operand']
  %s0 = inlined_call_operand.hbm [shape: f32[16,128], index: 0, kind: input, shape index: {}]
  %s1 = inlined_call_operand.hbm [shape: f32[16,128], index: 1, kind: input, shape index: {}]
  %s2 = inlined_call_operand.hbm [shape: f32[4,128], index: 2, kind: input, shape index: {}]
  %s3 = inlined_call_operand.hbm [shape: f32[128,256], index: 3, kind: input, shape index: {}]
  %s4 = inlined_call_operand.vmem [shape: f32[1,256], index: 4, kind: input, shape index: {}]
  %s5 = inlined_call_operand.hbm [shape: f32[16,128], index: 5, kind: output, shape index: {0}]
  %s6 = inlined_call_operand.vmem [shape: f32[16,1], index: 6, kind: output, shape index: {1}]
  %s7 = inlined_call_operand.vmem [shape: f32[16,1], index: 7, kind: output, shape index: {2}]
  %8 = xla_tuple %s5, %s6, %s7
  %s9 = sld [smem:[#allocation0]]
  $region62: #{tpu_custom_call.1} parent=0
    _
  %s11 = ssub.s32 1, %s9
  %s12 = scalar_select 0, %s11, %s9
  $region1: #{tpu_custom_call.1} parent=0
    #allocation4 [shape = 'u8[8192]{0}', space=vmem, size = 0x2000, scoped, tag = 'input window, operand 0, single buffered']
    #allocation5 [shape = 's32[1]{0}', space=sflag, size = 0x4, scoped, tag = 'scoped memory for tpu_custom_call.1']
    #allocation6 [shape = 's32[1]{0}', space=sflag, size = 0x4, scoped, tag = 'scoped memory for tpu_custom_call.1']
    #allocation7 [shape = 'u8[8192]{0}', space=vmem, size = 0x2000, scoped, tag = 'input window, operand 1, single buffered']
    #allocation8 [shape = 's32[1]{0}', space=sflag, size = 0x4, scoped, tag = 'scoped memory for tpu_custom_call.1']
    #allocation9 [shape = 'u8[2048]{0}', space=vmem, size = 0x800, scoped, tag = 'input window, operand 2, single buffered']
    #allocation10 [shape = 'u8[131072]{0}', space=vmem, size = 0x20000, scoped, tag = 'input window, operand 3, single buffered']
    #allocation11 [shape = 's32[1]{0}', space=sflag, size = 0x4, scoped, tag = 'scoped memory for tpu_custom_call.1']
    #allocation12 [shape = 'u8[8192]{0}', space=vmem, size = 0x2000, scoped, tag = 'output window, operand 0, single buffered']
    %13 = vsyncpa [#allocation5], 0
    %14 = vsyncpa [#allocation8], 0
    %15 = vsyncpa [#allocation11], 0
    %16 = vsyncpa [#allocation6], 0
    // Predicated region
    $region2: #{tpu_custom_call.1} parent=1 // pred_check
      _
    $region3: #{tpu_custom_call.1} parent=1 // pred_check_branch
      %18 = sbr.rel (0) target = $region5
    $region4: #{tpu_custom_call.1} parent=1 // pred_region
      %s20 = ssub.s32 256, 256
      %21 = vsyncadd [#allocation5], %s20
      %s22 = sshll.u32 [#allocation4], 4
      %s23 = int_to_ptr.vmem [resolvable:$true] %s22
      %28 = dma.hbm_to_vmem [thread:$0]  %s0, 256, %s23, [#allocation5], 128, 128, 8
    $region5: #{tpu_custom_call.1} parent=1 // pred_fallthru
      _
    // Predicated region
    $region6: #{tpu_custom_call.1} parent=1 // pred_check
      _
    $region7: #{tpu_custom_call.1} parent=1 // pred_check_branch
      %30 = sbr.rel (0) target = $region9
    $region8: #{tpu_custom_call.1} parent=1 // pred_region
      %s32 = ssub.s32 256, 256
      %33 = vsyncadd [#allocation8], %s32
      %s34 = sshll.u32 [#allocation7], 4
      %s35 = int_to_ptr.vmem [resolvable:$true] %s34
      %40 = dma.hbm_to_vmem [thread:$0]  %s1, 256, %s35, [#allocation8], 128, 128, 8
    $region9: #{tpu_custom_call.1} parent=1 // pred_fallthru
      _
    // Predicated region
    $region10: #{tpu_custom_call.1} parent=1 // pred_check
      _
    $region11: #{tpu_custom_call.1} parent=1 // pred_check_branch
      %42 = sbr.rel (0) target = $region13
    $region12: #{tpu_custom_call.1} parent=1 // pred_region
      %s44 = ssub.s32 64, 64
      %45 = vsyncadd [#allocation8], %s44
      %s47 = sshll.u32 [#allocation9], 4
      %s48 = int_to_ptr.vmem [resolvable:$true] %s47
      %50 = dma.hbm_to_vmem [thread:$0]  %s2, 64, %s48, [#allocation8]
    $region13: #{tpu_custom_call.1} parent=1 // pred_fallthru
      _
    // Predicated region
    $region14: #{tpu_custom_call.1} parent=1 // pred_check
      _
    $region15: #{tpu_custom_call.1} parent=1 // pred_check_branch
      %52 = sbr.rel (0) target = $region17
    $region16: #{tpu_custom_call.1} parent=1 // pred_region
      %s54 = ssub.s32 4096, 4096
      %55 = vsyncadd [#allocation11], %s54
      %s56 = sshll.u32 [#allocation10], 4
      %s57 = int_to_ptr.vmem [resolvable:$true] %s56
      %62 = dma.hbm_to_vmem [thread:$0]  %s3, 4096, %s57, [#allocation11], 256, 256, 16
    $region17: #{tpu_custom_call.1} parent=1 // pred_fallthru
      _
    // Predicated region
    $region18: #{tpu_custom_call.1} parent=1 // pred_check
      _
    $region19: #{tpu_custom_call.1} parent=1 // pred_check_branch
      %64 = sbr.rel (0) target = $region21
    $region20: #{tpu_custom_call.1} parent=1 // pred_region
      _
    $region21: #{tpu_custom_call.1} parent=1 // pred_fallthru
      _
    // Predicated region
    $region22: #{tpu_custom_call.1} parent=1 // pred_check
      _
    $region23: #{tpu_custom_call.1} parent=1 // pred_check_branch
      %66 = sbr.rel (0) target = $region25
    $region24: #{tpu_custom_call.1} parent=1 // pred_region
      %67 = dma.done [#allocation5], 256
    $region25: #{tpu_custom_call.1} parent=1 // pred_fallthru
      _
    // Predicated region
    $region26: #{tpu_custom_call.1} parent=1 // pred_check
      _
    $region27: #{tpu_custom_call.1} parent=1 // pred_check_branch
      %69 = sbr.rel (0) target = $region29
    $region28: #{tpu_custom_call.1} parent=1 // pred_region
      %70 = dma.done [#allocation8], 256
    $region29: #{tpu_custom_call.1} parent=1 // pred_fallthru
      _
    // Predicated region
    $region30: #{tpu_custom_call.1} parent=1 // pred_check
      _
    $region31: #{tpu_custom_call.1} parent=1 // pred_check_branch
      %72 = sbr.rel (0) target = $region33
    $region32: #{tpu_custom_call.1} parent=1 // pred_region
      %73 = dma.done [#allocation8], 64
    $region33: #{tpu_custom_call.1} parent=1 // pred_fallthru
      _
    // Predicated region
    $region34: #{tpu_custom_call.1} parent=1 // pred_check
      _
    $region35: #{tpu_custom_call.1} parent=1 // pred_check_branch
      %75 = sbr.rel (0) target = $region37
    $region36: #{tpu_custom_call.1} parent=1 // pred_region
      %76 = dma.done [#allocation11], 4096
    $region37: #{tpu_custom_call.1} parent=1 // pred_fallthru
      _
    %v77 = vld [vmem:[#allocation4] sm:$0xff]
    %v78 = vld [vmem:[#allocation4 + $0x8] sm:$0xff]
    %79 = vst [vmem:[#allocation2] sm:$0xff] %v77
    %80 = vst [vmem:[#allocation2 + $0x8] sm:$0xff] %v78
    %vm81 = vcmask 7168
    %82 = vst.msk [vmem:[#allocation3] sm:$0xff] %vm81, 0.0
    %83 = vst.msk [vmem:[#allocation3 + $0x8] sm:$0xff] %vm81, 0.0
    %84 = vst [vmem:[#allocation12] sm:$0xff] 0.0
    %85 = vst [vmem:[#allocation12 + $0x8] sm:$0xff] 0.0
    %86 = vst.msk [vmem:[%s6] sm:$0xff] %vm81, 0.0
    %87 = vst.msk [vmem:[%s6 + $0x8] sm:$0xff] %vm81, 0.0
    %88 = vst.msk [vmem:[%s7] sm:$0xff] %vm81, 0.0
    %89 = vst.msk [vmem:[%s7 + $0x8] sm:$0xff] %vm81, 0.0
    %v90 = vld [vmem:[#allocation2] sm:$0xff]
    %v91 = vld [vmem:[#allocation2 + $0x8] sm:$0xff]
    %v92 = vld [vmem:[#allocation7] sm:$0xff]
    %v93 = vld [vmem:[#allocation7 + $0x8] sm:$0xff]
    %v94 = vadd.f32 %v90, %v92
    %v95 = vadd.f32 %v91, %v93
    %v96 = vld [vmem:[#allocation9] sm:$0x1]
    %v97 = vlaneseq
    %v98 = vshrl.u32 %v97, 7
    %v99 = vsub.s32 0, %v98
    %v100 = vrot.slane %v96, %v99
    %v101 = vadd.f32 %v94, %v100
    %v102 = vadd.f32 %v95, %v100
    %v103 = vld [vmem:[#allocation10] sm:$0xff]
    %v104 = vld [vmem:[#allocation10 + $0x8] sm:$0xff]
    %v105 = vld [vmem:[#allocation10 + $0x10] sm:$0xff]
    %v106 = vld [vmem:[#allocation10 + $0x18] sm:$0xff]
    %v107 = vld [vmem:[#allocation10 + $0x20] sm:$0xff]
    %v108 = vld [vmem:[#allocation10 + $0x28] sm:$0xff]
    %v109 = vld [vmem:[#allocation10 + $0x30] sm:$0xff]
    %v110 = vld [vmem:[#allocation10 + $0x38] sm:$0xff]
    %v111 = vld [vmem:[#allocation10 + $0x40] sm:$0xff]
    %v112 = vld [vmem:[#allocation10 + $0x48] sm:$0xff]
    %v113 = vld [vmem:[#allocation10 + $0x50] sm:$0xff]
    %v114 = vld [vmem:[#allocation10 + $0x58] sm:$0xff]
    %v115 = vld [vmem:[#allocation10 + $0x60] sm:$0xff]
    %v116 = vld [vmem:[#allocation10 + $0x68] sm:$0xff]
    %v117 = vld [vmem:[#allocation10 + $0x70] sm:$0xff]
    %v118 = vld [vmem:[#allocation10 + $0x78] sm:$0xff]
    %v119 = vld [vmem:[#allocation10 + $0x80] sm:$0xff]
    %v120 = vld [vmem:[#allocation10 + $0x88] sm:$0xff]
    %v121 = vld [vmem:[#allocation10 + $0x90] sm:$0xff]
    %v122 = vld [vmem:[#allocation10 + $0x98] sm:$0xff]
    %v123 = vld [vmem:[#allocation10 + $0xa0] sm:$0xff]
    %v124 = vld [vmem:[#allocation10 + $0xa8] sm:$0xff]
    %v125 = vld [vmem:[#allocation10 + $0xb0] sm:$0xff]
    %v126 = vld [vmem:[#allocation10 + $0xb8] sm:$0xff]
    %v127 = vld [vmem:[#allocation10 + $0xc0] sm:$0xff]
    %v128 = vld [vmem:[#allocation10 + $0xc8] sm:$0xff]
    %v129 = vld [vmem:[#allocation10 + $0xd0] sm:$0xff]
    %v130 = vld [vmem:[#allocation10 + $0xd8] sm:$0xff]
    %v131 = vld [vmem:[#allocation10 + $0xe0] sm:$0xff]
    %v132 = vld [vmem:[#allocation10 + $0xe8] sm:$0xff]
    %v133 = vld [vmem:[#allocation10 + $0xf0] sm:$0xff]
    %v134 = vld [vmem:[#allocation10 + $0xf8] sm:$0xff]
    %v135 = vld [vmem:[%s4] sm:$0x3]
    %v137 = vlaneseq
    %v138 = vshrl.u32 %v137, 7
    %v139 = vsub.s32 0, %v138
    %v140 = vrot.slane %v135, %v139
    %v141 = vlaneseq
    %v142 = vshrl.u32 %v141, 7
    %v143 = vsub.s32 1, %v142
    %v144 = vrot.slane %v135, %v143
    %147 = vmatprep.subr.mxu0 %v134
    %148 = vmatpush1.msra.mxu0 %v133
    %149 = vmatprep.subr.mxu0 %v132
    %150 = vmatpush1.msra.mxu0 %v131
    %151 = vmatprep.subr.mxu0 %v130
    %152 = vmatpush1.msra.mxu0 %v129
    %153 = vmatprep.subr.mxu0 %v128
    %154 = vmatpush1.msra.mxu0 %v127
    %155 = vmatprep.subr.mxu0 %v126
    %156 = vmatpush1.msra.mxu0 %v125
    %157 = vmatprep.subr.mxu0 %v124
    %158 = vmatpush1.msra.mxu0 %v123
    %159 = vmatprep.subr.mxu0 %v122
    %160 = vmatpush1.msra.mxu0 %v121
    %161 = vmatprep.subr.mxu0 %v120
    %162 = vmatpush1.msra.mxu0 %v119
    %163 = vmatprep.subr.mxu0 %v118
    %164 = vmatpush1.msra.mxu0 %v117
    %165 = vmatprep.subr.mxu0 %v116
    %166 = vmatpush1.msra.mxu0 %v115
    %167 = vmatprep.subr.mxu0 %v114
    %168 = vmatpush1.msra.mxu0 %v113
    %169 = vmatprep.subr.mxu0 %v112
    %170 = vmatpush1.msra.mxu0 %v111
    %171 = vmatprep.subr.mxu0 %v110
    %172 = vmatpush1.msra.mxu0 %v109
    %173 = vmatprep.subr.mxu0 %v108
    %174 = vmatpush1.msra.mxu0 %v107
    %175 = vmatprep.subr.mxu0 %v106
    %176 = vmatpush1.msra.mxu0 %v105
    %177 = vmatprep.subr.mxu0 %v104
    %178 = vmatpush1.msra.mxu0 %v103
    %179 = vmatprep.subr.mxu0 0.0
    %180 = vmatpush2.msra.mxu0 0.0
    %181 = vmatprep.subr.mxu0 0.0
    %182 = vmatpush2.msra.mxu0 0.0
    %183 = vmatprep.subr.mxu0 0.0
    %184 = vmatpush2.msra.mxu0 0.0
    %185 = vmatprep.subr.mxu0 0.0
    %186 = vmatpush2.msra.mxu0 0.0
    %187 = vmatprep.subr.mxu0 0.0
    %188 = vmatpush2.msra.mxu0 0.0
    %189 = vmatprep.subr.mxu0 0.0
    %190 = vmatpush2.msra.mxu0 0.0
    %191 = vmatprep.subr.mxu0 0.0
    %192 = vmatpush2.msra.mxu0 0.0
    %193 = vmatprep.subr.mxu0 0.0
    %194 = vmatpush2.msra.mxu0 0.0
    %195 = vmatprep.subr.mxu0 0.0
    %196 = vmatpush2.msra.mxu0 0.0
    %197 = vmatprep.subr.mxu0 0.0
    %198 = vmatpush2.msra.mxu0 0.0
    %199 = vmatprep.subr.mxu0 0.0
    %200 = vmatpush2.msra.mxu0 0.0
    %201 = vmatprep.subr.mxu0 0.0
    %202 = vmatpush2.msra.mxu0 0.0
    %203 = vmatprep.subr.mxu0 0.0
    %204 = vmatpush2.msra.mxu0 0.0
    %205 = vmatprep.subr.mxu0 0.0
    %206 = vmatpush2.msra.mxu0 0.0
    %207 = vmatprep.subr.mxu0 0.0
    %208 = vmatpush2.msra.mxu0 0.0
    %209 = vmatprep.subr.mxu0 0.0
    %210 = vmatpush2.msra.mxu0 0.0
    %211 = vmatprep.mubr.f32.mxu0 0.0
    %212 = vmatmul.mubr.f32.gmra.mxu0 %v101
    %v213 = vpop.f32.mrf.mxu0
    %v214 = vadd.f32 %v140, %v213
    %v215 = vpop.f32.mrf.mxu0
    %v216 = vadd.f32 %v144, %v215
    %217 = vmatprep.mubr.f32.mxu0 0.0
    %218 = vmatmul.mubr.f32.gmra.mxu0 %v102
    %v219 = vpop.f32.mrf.mxu0
    %v220 = vadd.f32 %v140, %v219
    %v221 = vpop.f32.mrf.mxu0
    %v222 = vadd.f32 %v144, %v221
    %223 = vdwg.mxu0
    %v224 = vxor.u32 %v216, 2147483648
    %v225 = vxor.u32 %v222, 2147483648
    %v226 = vmul.f32 %v224, 1.442695
    %v227 = vpow.pop %v226
    %v228 = vmul.f32 %v225, 1.442695
    %v229 = vpow.pop %v228
    %v230 = vadd.f32 %v227, 1.0
    %v231 = vadd.f32 %v229, 1.0
    %v232 = vrcp.pop %v230
    %v233 = vmul.f32 1.0, %v232
    %v234 = vrcp.pop %v231
    %v235 = vmul.f32 1.0, %v234
    %v236 = vmax.f32 %v214, 0.0
    %v237 = vmax.f32 %v220, 0.0
    %v238 = vld [vmem:[#allocation3] sm:$0xff]
    %v239 = vld [vmem:[#allocation3 + $0x8] sm:$0xff]
    %v240 = vld [vmem:[%s6] sm:$0xff]
    %v241 = vld [vmem:[%s6 + $0x8] sm:$0xff]
    %v242 = vld [vmem:[%s7] sm:$0xff]
    %v243 = vld [vmem:[%s7 + $0x8] sm:$0xff]
    %vm244 = vcmp.lt.f32.partialorder %v238, 1.0
    %vm245 = vcmp.lt.f32.partialorder %v239, 1.0
    %v246 = vsel %vm244, 1.0, 0.0
    %v247 = vsel %vm245, 1.0, 0.0
    %v248 = vmul.f32 %v233, %v246
    %v249 = vmul.f32 %v235, %v247
    %v250 = vadd.f32 %v238, %v248
    %v251 = vadd.f32 %v239, %v249
    %vm252 = vcmp.gt.f32.partialorder %v250, 0.9
    %vm253 = vcmp.gt.f32.partialorder %v251, 0.9
    %v254 = vsel %vm252, %v246, 0.0
    %v255 = vsel %vm253, %v247, 0.0
    %vm256 = vcmp.le.f32.partialorder %v250, 0.9
    %vm257 = vcmp.le.f32.partialorder %v251, 0.9
    %v258 = vsel %vm256, %v246, 0.0
    %v259 = vsel %vm257, %v247, 0.0
    %v260 = vmul.f32 %v233, %v258
    %v261 = vmul.f32 %v235, %v259
    %v262 = vadd.f32 %v238, %v260
    %v263 = vadd.f32 %v239, %v261
    %v264 = vsub.f32 1.0, %v262
    %v265 = vsub.f32 1.0, %v263
    %v266 = vmul.f32 %v254, %v264
    %v267 = vmul.f32 %v255, %v265
    %v268 = vadd.f32 %v240, %v266
    %v269 = vadd.f32 %v241, %v267
    %v270 = vmul.f32 %v254, %v268
    %v271 = vmul.f32 %v255, %v269
    %v272 = vadd.f32 %v262, %v270
    %v273 = vadd.f32 %v263, %v271
    %v274 = vadd.f32 %v242, %v258
    %v275 = vadd.f32 %v243, %v259
    %v276 = vadd.f32 %v274, %v254
    %v277 = vadd.f32 %v275, %v255
    %v278 = vadd.f32 %v260, %v270
    %v279 = vadd.f32 %v261, %v271
    %281 = vset.pattern.permute.xlu0 0
    %282 = vperm.xlu0 %281, %v278
    %v283 = vpop.permute.xlu0 %282
    %286 = vset.pattern.permute.xlu0 0
    %287 = vperm.xlu0 %286, %v279
    %v288 = vpop.permute.xlu0 %287
    %v290 = vmul.f32 %v236, %v283
    %v291 = vmul.f32 %v237, %v288
    %v292 = vld [vmem:[#allocation12] sm:$0xff]
    %v293 = vld [vmem:[#allocation12 + $0x8] sm:$0xff]
    %v294 = vsub.f32 1.0, %v278
    %v295 = vsub.f32 1.0, %v279
    %297 = vset.pattern.permute.xlu0 0
    %298 = vperm.xlu0 %297, %v294
    %v299 = vpop.permute.xlu0 %298
    %302 = vset.pattern.permute.xlu0 0
    %303 = vperm.xlu0 %302, %v295
    %v304 = vpop.permute.xlu0 %303
    %v306 = vmul.f32 %v292, %v299
    %v307 = vmul.f32 %v293, %v304
    %v308 = vadd.f32 %v290, %v306
    %v309 = vadd.f32 %v291, %v307
    %310 = vst [vmem:[#allocation12] sm:$0xff] %v308
    %311 = vst [vmem:[#allocation12 + $0x8] sm:$0xff] %v309
    %312 = vst [vmem:[#allocation2] sm:$0xff] %v236
    %313 = vst [vmem:[#allocation2 + $0x8] sm:$0xff] %v237
    %314 = vst.msk [vmem:[#allocation3] sm:$0xff] %vm81, %v272
    %315 = vst.msk [vmem:[#allocation3 + $0x8] sm:$0xff] %vm81, %v273
    %316 = vst.msk [vmem:[%s6] sm:$0xff] %vm81, %v268
    %317 = vst.msk [vmem:[%s6 + $0x8] sm:$0xff] %vm81, %v269
    %318 = vst.msk [vmem:[%s7] sm:$0xff] %vm81, %v276
    %319 = vst.msk [vmem:[%s7 + $0x8] sm:$0xff] %vm81, %v277
    %v320 = vld [vmem:[#allocation2] sm:$0xff]
    %v321 = vld [vmem:[#allocation2 + $0x8] sm:$0xff]
    %v322 = vld [vmem:[#allocation7] sm:$0xff]
    %v323 = vld [vmem:[#allocation7 + $0x8] sm:$0xff]
    %v324 = vadd.f32 %v320, %v322
    %v325 = vadd.f32 %v321, %v323
    %v326 = vld [vmem:[#allocation9 + $0x1] sm:$0x1]
    %v327 = vlaneseq
    %v328 = vshrl.u32 %v327, 7
    %v329 = vsub.s32 0, %v328
    %v330 = vrot.slane %v326, %v329
    %v331 = vadd.f32 %v324, %v330
    %v332 = vadd.f32 %v325, %v330
    %v333 = vld [vmem:[#allocation10] sm:$0xff]
    %v334 = vld [vmem:[#allocation10 + $0x8] sm:$0xff]
    %v335 = vld [vmem:[#allocation10 + $0x10] sm:$0xff]
    %v336 = vld [vmem:[#allocation10 + $0x18] sm:$0xff]
    %v337 = vld [vmem:[#allocation10 + $0x20] sm:$0xff]
    %v338 = vld [vmem:[#allocation10 + $0x28] sm:$0xff]
    %v339 = vld [vmem:[#allocation10 + $0x30] sm:$0xff]
    %v340 = vld [vmem:[#allocation10 + $0x38] sm:$0xff]
    %v341 = vld [vmem:[#allocation10 + $0x40] sm:$0xff]
    %v342 = vld [vmem:[#allocation10 + $0x48] sm:$0xff]
    %v343 = vld [vmem:[#allocation10 + $0x50] sm:$0xff]
    %v344 = vld [vmem:[#allocation10 + $0x58] sm:$0xff]
    %v345 = vld [vmem:[#allocation10 + $0x60] sm:$0xff]
    %v346 = vld [vmem:[#allocation10 + $0x68] sm:$0xff]
    %v347 = vld [vmem:[#allocation10 + $0x70] sm:$0xff]
    %v348 = vld [vmem:[#allocation10 + $0x78] sm:$0xff]
    %v349 = vld [vmem:[#allocation10 + $0x80] sm:$0xff]
    %v350 = vld [vmem:[#allocation10 + $0x88] sm:$0xff]
    %v351 = vld [vmem:[#allocation10 + $0x90] sm:$0xff]
    %v352 = vld [vmem:[#allocation10 + $0x98] sm:$0xff]
    %v353 = vld [vmem:[#allocation10 + $0xa0] sm:$0xff]
    %v354 = vld [vmem:[#allocation10 + $0xa8] sm:$0xff]
    %v355 = vld [vmem:[#allocation10 + $0xb0] sm:$0xff]
    %v356 = vld [vmem:[#allocation10 + $0xb8] sm:$0xff]
    %v357 = vld [vmem:[#allocation10 + $0xc0] sm:$0xff]
    %v358 = vld [vmem:[#allocation10 + $0xc8] sm:$0xff]
    %v359 = vld [vmem:[#allocation10 + $0xd0] sm:$0xff]
    %v360 = vld [vmem:[#allocation10 + $0xd8] sm:$0xff]
    %v361 = vld [vmem:[#allocation10 + $0xe0] sm:$0xff]
    %v362 = vld [vmem:[#allocation10 + $0xe8] sm:$0xff]
    %v363 = vld [vmem:[#allocation10 + $0xf0] sm:$0xff]
    %v364 = vld [vmem:[#allocation10 + $0xf8] sm:$0xff]
    %v365 = vld [vmem:[%s4] sm:$0x3]
    %v367 = vlaneseq
    %v368 = vshrl.u32 %v367, 7
    %v369 = vsub.s32 0, %v368
    %v370 = vrot.slane %v365, %v369
    %v371 = vlaneseq
    %v372 = vshrl.u32 %v371, 7
    %v373 = vsub.s32 1, %v372
    %v374 = vrot.slane %v365, %v373
    %377 = vmatprep.subr.mxu0 %v364
    %378 = vmatpush1.msra.mxu0 %v363
    %379 = vmatprep.subr.mxu0 %v362
    %380 = vmatpush1.msra.mxu0 %v361
    %381 = vmatprep.subr.mxu0 %v360
    %382 = vmatpush1.msra.mxu0 %v359
    %383 = vmatprep.subr.mxu0 %v358
    %384 = vmatpush1.msra.mxu0 %v357
    %385 = vmatprep.subr.mxu0 %v356
    %386 = vmatpush1.msra.mxu0 %v355
    %387 = vmatprep.subr.mxu0 %v354
    %388 = vmatpush1.msra.mxu0 %v353
    %389 = vmatprep.subr.mxu0 %v352
    %390 = vmatpush1.msra.mxu0 %v351
    %391 = vmatprep.subr.mxu0 %v350
    %392 = vmatpush1.msra.mxu0 %v349
    %393 = vmatprep.subr.mxu0 %v348
    %394 = vmatpush1.msra.mxu0 %v347
    %395 = vmatprep.subr.mxu0 %v346
    %396 = vmatpush1.msra.mxu0 %v345
    %397 = vmatprep.subr.mxu0 %v344
    %398 = vmatpush1.msra.mxu0 %v343
    %399 = vmatprep.subr.mxu0 %v342
    %400 = vmatpush1.msra.mxu0 %v341
    %401 = vmatprep.subr.mxu0 %v340
    %402 = vmatpush1.msra.mxu0 %v339
    %403 = vmatprep.subr.mxu0 %v338
    %404 = vmatpush1.msra.mxu0 %v337
    %405 = vmatprep.subr.mxu0 %v336
    %406 = vmatpush1.msra.mxu0 %v335
    %407 = vmatprep.subr.mxu0 %v334
    %408 = vmatpush1.msra.mxu0 %v333
    %409 = vmatprep.subr.mxu0 0.0
    %410 = vmatpush2.msra.mxu0 0.0
    %411 = vmatprep.subr.mxu0 0.0
    %412 = vmatpush2.msra.mxu0 0.0
    %413 = vmatprep.subr.mxu0 0.0
    %414 = vmatpush2.msra.mxu0 0.0
    %415 = vmatprep.subr.mxu0 0.0
    %416 = vmatpush2.msra.mxu0 0.0
    %417 = vmatprep.subr.mxu0 0.0
    %418 = vmatpush2.msra.mxu0 0.0
    %419 = vmatprep.subr.mxu0 0.0
    %420 = vmatpush2.msra.mxu0 0.0
    %421 = vmatprep.subr.mxu0 0.0
    %422 = vmatpush2.msra.mxu0 0.0
    %423 = vmatprep.subr.mxu0 0.0
    %424 = vmatpush2.msra.mxu0 0.0
    %425 = vmatprep.subr.mxu0 0.0
    %426 = vmatpush2.msra.mxu0 0.0
    %427 = vmatprep.subr.mxu0 0.0
    %428 = vmatpush2.msra.mxu0 0.0
    %429 = vmatprep.subr.mxu0 0.0
    %430 = vmatpush2.msra.mxu0 0.0
    %431 = vmatprep.subr.mxu0 0.0
    %432 = vmatpush2.msra.mxu0 0.0
    %433 = vmatprep.subr.mxu0 0.0
    %434 = vmatpush2.msra.mxu0 0.0
    %435 = vmatprep.subr.mxu0 0.0
    %436 = vmatpush2.msra.mxu0 0.0
    %437 = vmatprep.subr.mxu0 0.0
    %438 = vmatpush2.msra.mxu0 0.0
    %439 = vmatprep.subr.mxu0 0.0
    %440 = vmatpush2.msra.mxu0 0.0
    %441 = vmatprep.mubr.f32.mxu0 0.0
    %442 = vmatmul.mubr.f32.gmra.mxu0 %v331
    %v443 = vpop.f32.mrf.mxu0
    %v444 = vadd.f32 %v370, %v443
    %v445 = vpop.f32.mrf.mxu0
    %v446 = vadd.f32 %v374, %v445
    %447 = vmatprep.mubr.f32.mxu0 0.0
    %448 = vmatmul.mubr.f32.gmra.mxu0 %v332
    %v449 = vpop.f32.mrf.mxu0
    %v450 = vadd.f32 %v370, %v449
    %v451 = vpop.f32.mrf.mxu0
    %v452 = vadd.f32 %v374, %v451
    %453 = vdwg.mxu0
    %v454 = vxor.u32 %v446, 2147483648
    %v455 = vxor.u32 %v452, 2147483648
    %v456 = vmul.f32 %v454, 1.442695
    %v457 = vpow.pop %v456
    %v458 = vmul.f32 %v455, 1.442695
    %v459 = vpow.pop %v458
    %v460 = vadd.f32 %v457, 1.0
    %v461 = vadd.f32 %v459, 1.0
    %v462 = vrcp.pop %v460
    %v463 = vmul.f32 1.0, %v462
    %v464 = vrcp.pop %v461
    %v465 = vmul.f32 1.0, %v464
    %v466 = vmax.f32 %v444, 0.0
    %v467 = vmax.f32 %v450, 0.0
    %v468 = vld [vmem:[#allocation3] sm:$0xff]
    %v469 = vld [vmem:[#allocation3 + $0x8] sm:$0xff]
    %v470 = vld [vmem:[%s6] sm:$0xff]
    %v471 = vld [vmem:[%s6 + $0x8] sm:$0xff]
    %v472 = vld [vmem:[%s7] sm:$0xff]
    %v473 = vld [vmem:[%s7 + $0x8] sm:$0xff]
    %vm474 = vcmp.lt.f32.partialorder %v468, 1.0
    %vm475 = vcmp.lt.f32.partialorder %v469, 1.0
    %v476 = vsel %vm474, 1.0, 0.0
    %v477 = vsel %vm475, 1.0, 0.0
    %v478 = vmul.f32 %v463, %v476
    %v479 = vmul.f32 %v465, %v477
    %v480 = vadd.f32 %v468, %v478
    %v481 = vadd.f32 %v469, %v479
    %vm482 = vcmp.gt.f32.partialorder %v480, 0.9
    %vm483 = vcmp.gt.f32.partialorder %v481, 0.9
    %v484 = vsel %vm482, %v476, 0.0
    %v485 = vsel %vm483, %v477, 0.0
    %vm486 = vcmp.le.f32.partialorder %v480, 0.9
    %vm487 = vcmp.le.f32.partialorder %v481, 0.9
    %v488 = vsel %vm486, %v476, 0.0
    %v489 = vsel %vm487, %v477, 0.0
    %v490 = vmul.f32 %v463, %v488
    %v491 = vmul.f32 %v465, %v489
    %v492 = vadd.f32 %v468, %v490
    %v493 = vadd.f32 %v469, %v491
    %v494 = vsub.f32 1.0, %v492
    %v495 = vsub.f32 1.0, %v493
    %v496 = vmul.f32 %v484, %v494
    %v497 = vmul.f32 %v485, %v495
    %v498 = vadd.f32 %v470, %v496
    %v499 = vadd.f32 %v471, %v497
    %v500 = vmul.f32 %v484, %v498
    %v501 = vmul.f32 %v485, %v499
    %v502 = vadd.f32 %v492, %v500
    %v503 = vadd.f32 %v493, %v501
    %v504 = vadd.f32 %v472, %v488
    %v505 = vadd.f32 %v473, %v489
    %v506 = vadd.f32 %v504, %v484
    %v507 = vadd.f32 %v505, %v485
    %v508 = vadd.f32 %v490, %v500
    %v509 = vadd.f32 %v491, %v501
    %511 = vset.pattern.permute.xlu0 0
    %512 = vperm.xlu0 %511, %v508
    %v513 = vpop.permute.xlu0 %512
    %516 = vset.pattern.permute.xlu0 0
    %517 = vperm.xlu0 %516, %v509
    %v518 = vpop.permute.xlu0 %517
    %v520 = vmul.f32 %v466, %v513
    %v521 = vmul.f32 %v467, %v518
    %v522 = vld [vmem:[#allocation12] sm:$0xff]
    %v523 = vld [vmem:[#allocation12 + $0x8] sm:$0xff]
    %v524 = vsub.f32 1.0, %v508
    %v525 = vsub.f32 1.0, %v509
    %527 = vset.pattern.permute.xlu0 0
    %528 = vperm.xlu0 %527, %v524
    %v529 = vpop.permute.xlu0 %528
    %532 = vset.pattern.permute.xlu0 0
    %533 = vperm.xlu0 %532, %v525
    %v534 = vpop.permute.xlu0 %533
    %v536 = vmul.f32 %v522, %v529
    %v537 = vmul.f32 %v523, %v534
    %v538 = vadd.f32 %v520, %v536
    %v539 = vadd.f32 %v521, %v537
    %540 = vst [vmem:[#allocation12] sm:$0xff] %v538
    %541 = vst [vmem:[#allocation12 + $0x8] sm:$0xff] %v539
    %542 = vst [vmem:[#allocation2] sm:$0xff] %v466
    %543 = vst [vmem:[#allocation2 + $0x8] sm:$0xff] %v467
    %544 = vst.msk [vmem:[#allocation3] sm:$0xff] %vm81, %v502
    %545 = vst.msk [vmem:[#allocation3 + $0x8] sm:$0xff] %vm81, %v503
    %546 = vst.msk [vmem:[%s6] sm:$0xff] %vm81, %v498
    %547 = vst.msk [vmem:[%s6 + $0x8] sm:$0xff] %vm81, %v499
    %548 = vst.msk [vmem:[%s7] sm:$0xff] %vm81, %v506
    %549 = vst.msk [vmem:[%s7 + $0x8] sm:$0xff] %vm81, %v507
    %v550 = vld [vmem:[#allocation2] sm:$0xff]
    %v551 = vld [vmem:[#allocation2 + $0x8] sm:$0xff]
    %v552 = vld [vmem:[#allocation7] sm:$0xff]
    %v553 = vld [vmem:[#allocation7 + $0x8] sm:$0xff]
    %v554 = vadd.f32 %v550, %v552
    %v555 = vadd.f32 %v551, %v553
    %v556 = vld [vmem:[#allocation9 + $0x2] sm:$0x1]
    %v557 = vlaneseq
    %v558 = vshrl.u32 %v557, 7
    %v559 = vsub.s32 0, %v558
    %v560 = vrot.slane %v556, %v559
    %v561 = vadd.f32 %v554, %v560
    %v562 = vadd.f32 %v555, %v560
    %v563 = vld [vmem:[#allocation10] sm:$0xff]
    %v564 = vld [vmem:[#allocation10 + $0x8] sm:$0xff]
    %v565 = vld [vmem:[#allocation10 + $0x10] sm:$0xff]
    %v566 = vld [vmem:[#allocation10 + $0x18] sm:$0xff]
    %v567 = vld [vmem:[#allocation10 + $0x20] sm:$0xff]
    %v568 = vld [vmem:[#allocation10 + $0x28] sm:$0xff]
    %v569 = vld [vmem:[#allocation10 + $0x30] sm:$0xff]
    %v570 = vld [vmem:[#allocation10 + $0x38] sm:$0xff]
    %v571 = vld [vmem:[#allocation10 + $0x40] sm:$0xff]
    %v572 = vld [vmem:[#allocation10 + $0x48] sm:$0xff]
    %v573 = vld [vmem:[#allocation10 + $0x50] sm:$0xff]
    %v574 = vld [vmem:[#allocation10 + $0x58] sm:$0xff]
    %v575 = vld [vmem:[#allocation10 + $0x60] sm:$0xff]
    %v576 = vld [vmem:[#allocation10 + $0x68] sm:$0xff]
    %v577 = vld [vmem:[#allocation10 + $0x70] sm:$0xff]
    %v578 = vld [vmem:[#allocation10 + $0x78] sm:$0xff]
    %v579 = vld [vmem:[#allocation10 + $0x80] sm:$0xff]
    %v580 = vld [vmem:[#allocation10 + $0x88] sm:$0xff]
    %v581 = vld [vmem:[#allocation10 + $0x90] sm:$0xff]
    %v582 = vld [vmem:[#allocation10 + $0x98] sm:$0xff]
    %v583 = vld [vmem:[#allocation10 + $0xa0] sm:$0xff]
    %v584 = vld [vmem:[#allocation10 + $0xa8] sm:$0xff]
    %v585 = vld [vmem:[#allocation10 + $0xb0] sm:$0xff]
    %v586 = vld [vmem:[#allocation10 + $0xb8] sm:$0xff]
    %v587 = vld [vmem:[#allocation10 + $0xc0] sm:$0xff]
    %v588 = vld [vmem:[#allocation10 + $0xc8] sm:$0xff]
    %v589 = vld [vmem:[#allocation10 + $0xd0] sm:$0xff]
    %v590 = vld [vmem:[#allocation10 + $0xd8] sm:$0xff]
    %v591 = vld [vmem:[#allocation10 + $0xe0] sm:$0xff]
    %v592 = vld [vmem:[#allocation10 + $0xe8] sm:$0xff]
    %v593 = vld [vmem:[#allocation10 + $0xf0] sm:$0xff]
    %v594 = vld [vmem:[#allocation10 + $0xf8] sm:$0xff]
    %v595 = vld [vmem:[%s4] sm:$0x3]
    %v597 = vlaneseq
    %v598 = vshrl.u32 %v597, 7
    %v599 = vsub.s32 0, %v598
    %v600 = vrot.slane %v595, %v599
    %v601 = vlaneseq
    %v602 = vshrl.u32 %v601, 7
    %v603 = vsub.s32 1, %v602
    %v604 = vrot.slane %v595, %v603
    %607 = vmatprep.subr.mxu0 %v594
    %608 = vmatpush1.msra.mxu0 %v593
    %609 = vmatprep.subr.mxu0 %v592
    %610 = vmatpush1.msra.mxu0 %v591
    %611 = vmatprep.subr.mxu0 %v590
    %612 = vmatpush1.msra.mxu0 %v589
    %613 = vmatprep.subr.mxu0 %v588
    %614 = vmatpush1.msra.mxu0 %v587
    %615 = vmatprep.subr.mxu0 %v586
    %616 = vmatpush1.msra.mxu0 %v585
    %617 = vmatprep.subr.mxu0 %v584
    %618 = vmatpush1.msra.mxu0 %v583
    %619 = vmatprep.subr.mxu0 %v582
    %620 = vmatpush1.msra.mxu0 %v581
    %621 = vmatprep.subr.mxu0 %v580
    %622 = vmatpush1.msra.mxu0 %v579
    %623 = vmatprep.subr.mxu0 %v578
    %624 = vmatpush1.msra.mxu0 %v577
    %625 = vmatprep.subr.mxu0 %v576
    %626 = vmatpush1.msra.mxu0 %v575
    %627 = vmatprep.subr.mxu0 %v574
    %628 = vmatpush1.msra.mxu0 %v573
    %629 = vmatprep.subr.mxu0 %v572
    %630 = vmatpush1.msra.mxu0 %v571
    %631 = vmatprep.subr.mxu0 %v570
    %632 = vmatpush1.msra.mxu0 %v569
    %633 = vmatprep.subr.mxu0 %v568
    %634 = vmatpush1.msra.mxu0 %v567
    %635 = vmatprep.subr.mxu0 %v566
    %636 = vmatpush1.msra.mxu0 %v565
    %637 = vmatprep.subr.mxu0 %v564
    %638 = vmatpush1.msra.mxu0 %v563
    %639 = vmatprep.subr.mxu0 0.0
    %640 = vmatpush2.msra.mxu0 0.0
    %641 = vmatprep.subr.mxu0 0.0
    %642 = vmatpush2.msra.mxu0 0.0
    %643 = vmatprep.subr.mxu0 0.0
    %644 = vmatpush2.msra.mxu0 0.0
    %645 = vmatprep.subr.mxu0 0.0
    %646 = vmatpush2.msra.mxu0 0.0
    %647 = vmatprep.subr.mxu0 0.0
    %648 = vmatpush2.msra.mxu0 0.0
    %649 = vmatprep.subr.mxu0 0.0
    %650 = vmatpush2.msra.mxu0 0.0
    %651 = vmatprep.subr.mxu0 0.0
    %652 = vmatpush2.msra.mxu0 0.0
    %653 = vmatprep.subr.mxu0 0.0
    %654 = vmatpush2.msra.mxu0 0.0
    %655 = vmatprep.subr.mxu0 0.0
    %656 = vmatpush2.msra.mxu0 0.0
    %657 = vmatprep.subr.mxu0 0.0
    %658 = vmatpush2.msra.mxu0 0.0
    %659 = vmatprep.subr.mxu0 0.0
    %660 = vmatpush2.msra.mxu0 0.0
    %661 = vmatprep.subr.mxu0 0.0
    %662 = vmatpush2.msra.mxu0 0.0
    %663 = vmatprep.subr.mxu0 0.0
    %664 = vmatpush2.msra.mxu0 0.0
    %665 = vmatprep.subr.mxu0 0.0
    %666 = vmatpush2.msra.mxu0 0.0
    %667 = vmatprep.subr.mxu0 0.0
    %668 = vmatpush2.msra.mxu0 0.0
    %669 = vmatprep.subr.mxu0 0.0
    %670 = vmatpush2.msra.mxu0 0.0
    %671 = vmatprep.mubr.f32.mxu0 0.0
    %672 = vmatmul.mubr.f32.gmra.mxu0 %v561
    %v673 = vpop.f32.mrf.mxu0
    %v674 = vadd.f32 %v600, %v673
    %v675 = vpop.f32.mrf.mxu0
    %v676 = vadd.f32 %v604, %v675
    %677 = vmatprep.mubr.f32.mxu0 0.0
    %678 = vmatmul.mubr.f32.gmra.mxu0 %v562
    %v679 = vpop.f32.mrf.mxu0
    %v680 = vadd.f32 %v600, %v679
    %v681 = vpop.f32.mrf.mxu0
    %v682 = vadd.f32 %v604, %v681
    %683 = vdwg.mxu0
    %v684 = vxor.u32 %v676, 2147483648
    %v685 = vxor.u32 %v682, 2147483648
    %v686 = vmul.f32 %v684, 1.442695
    %v687 = vpow.pop %v686
    %v688 = vmul.f32 %v685, 1.442695
    %v689 = vpow.pop %v688
    %v690 = vadd.f32 %v687, 1.0
    %v691 = vadd.f32 %v689, 1.0
    %v692 = vrcp.pop %v690
    %v693 = vmul.f32 1.0, %v692
    %v694 = vrcp.pop %v691
    %v695 = vmul.f32 1.0, %v694
    %v696 = vmax.f32 %v674, 0.0
    %v697 = vmax.f32 %v680, 0.0
    %v698 = vld [vmem:[#allocation3] sm:$0xff]
    %v699 = vld [vmem:[#allocation3 + $0x8] sm:$0xff]
    %v700 = vld [vmem:[%s6] sm:$0xff]
    %v701 = vld [vmem:[%s6 + $0x8] sm:$0xff]
    %v702 = vld [vmem:[%s7] sm:$0xff]
    %v703 = vld [vmem:[%s7 + $0x8] sm:$0xff]
    %vm704 = vcmp.lt.f32.partialorder %v698, 1.0
    %vm705 = vcmp.lt.f32.partialorder %v699, 1.0
    %v706 = vsel %vm704, 1.0, 0.0
    %v707 = vsel %vm705, 1.0, 0.0
    %v708 = vmul.f32 %v693, %v706
    %v709 = vmul.f32 %v695, %v707
    %v710 = vadd.f32 %v698, %v708
    %v711 = vadd.f32 %v699, %v709
    %vm712 = vcmp.gt.f32.partialorder %v710, 0.9
    %vm713 = vcmp.gt.f32.partialorder %v711, 0.9
    %v714 = vsel %vm712, %v706, 0.0
    %v715 = vsel %vm713, %v707, 0.0
    %vm716 = vcmp.le.f32.partialorder %v710, 0.9
    %vm717 = vcmp.le.f32.partialorder %v711, 0.9
    %v718 = vsel %vm716, %v706, 0.0
    %v719 = vsel %vm717, %v707, 0.0
    %v720 = vmul.f32 %v693, %v718
    %v721 = vmul.f32 %v695, %v719
    %v722 = vadd.f32 %v698, %v720
    %v723 = vadd.f32 %v699, %v721
    %v724 = vsub.f32 1.0, %v722
    %v725 = vsub.f32 1.0, %v723
    %v726 = vmul.f32 %v714, %v724
    %v727 = vmul.f32 %v715, %v725
    %v728 = vadd.f32 %v700, %v726
    %v729 = vadd.f32 %v701, %v727
    %v730 = vmul.f32 %v714, %v728
    %v731 = vmul.f32 %v715, %v729
    %v732 = vadd.f32 %v722, %v730
    %v733 = vadd.f32 %v723, %v731
    %v734 = vadd.f32 %v702, %v718
    %v735 = vadd.f32 %v703, %v719
    %v736 = vadd.f32 %v734, %v714
    %v737 = vadd.f32 %v735, %v715
    %v738 = vadd.f32 %v720, %v730
    %v739 = vadd.f32 %v721, %v731
    %741 = vset.pattern.permute.xlu0 0
    %742 = vperm.xlu0 %741, %v738
    %v743 = vpop.permute.xlu0 %742
    %746 = vset.pattern.permute.xlu0 0
    %747 = vperm.xlu0 %746, %v739
    %v748 = vpop.permute.xlu0 %747
    %v750 = vmul.f32 %v696, %v743
    %v751 = vmul.f32 %v697, %v748
    %v752 = vld [vmem:[#allocation12] sm:$0xff]
    %v753 = vld [vmem:[#allocation12 + $0x8] sm:$0xff]
    %v754 = vsub.f32 1.0, %v738
    %v755 = vsub.f32 1.0, %v739
    %757 = vset.pattern.permute.xlu0 0
    %758 = vperm.xlu0 %757, %v754
    %v759 = vpop.permute.xlu0 %758
    %762 = vset.pattern.permute.xlu0 0
    %763 = vperm.xlu0 %762, %v755
    %v764 = vpop.permute.xlu0 %763
    %v766 = vmul.f32 %v752, %v759
    %v767 = vmul.f32 %v753, %v764
    %v768 = vadd.f32 %v750, %v766
    %v769 = vadd.f32 %v751, %v767
    %770 = vst [vmem:[#allocation12] sm:$0xff] %v768
    %771 = vst [vmem:[#allocation12 + $0x8] sm:$0xff] %v769
    %772 = vst [vmem:[#allocation2] sm:$0xff] %v696
    %773 = vst [vmem:[#allocation2 + $0x8] sm:$0xff] %v697
    %774 = vst.msk [vmem:[#allocation3] sm:$0xff] %vm81, %v732
    %775 = vst.msk [vmem:[#allocation3 + $0x8] sm:$0xff] %vm81, %v733
    %776 = vst.msk [vmem:[%s6] sm:$0xff] %vm81, %v728
    %777 = vst.msk [vmem:[%s6 + $0x8] sm:$0xff] %vm81, %v729
    %778 = vst.msk [vmem:[%s7] sm:$0xff] %vm81, %v736
    %779 = vst.msk [vmem:[%s7 + $0x8] sm:$0xff] %vm81, %v737
    %v780 = vld [vmem:[#allocation2] sm:$0xff]
    %v781 = vld [vmem:[#allocation2 + $0x8] sm:$0xff]
    %v782 = vld [vmem:[#allocation7] sm:$0xff]
    %v783 = vld [vmem:[#allocation7 + $0x8] sm:$0xff]
    %v784 = vadd.f32 %v780, %v782
    %v785 = vadd.f32 %v781, %v783
    %v786 = vld [vmem:[#allocation9 + $0x3] sm:$0x1]
    %v787 = vlaneseq
    %v788 = vshrl.u32 %v787, 7
    %v789 = vsub.s32 0, %v788
    %v790 = vrot.slane %v786, %v789
    %v791 = vadd.f32 %v784, %v790
    %v792 = vadd.f32 %v785, %v790
    %v793 = vld [vmem:[#allocation10] sm:$0xff]
    %v794 = vld [vmem:[#allocation10 + $0x8] sm:$0xff]
    %v795 = vld [vmem:[#allocation10 + $0x10] sm:$0xff]
    %v796 = vld [vmem:[#allocation10 + $0x18] sm:$0xff]
    %v797 = vld [vmem:[#allocation10 + $0x20] sm:$0xff]
    %v798 = vld [vmem:[#allocation10 + $0x28] sm:$0xff]
    %v799 = vld [vmem:[#allocation10 + $0x30] sm:$0xff]
    %v800 = vld [vmem:[#allocation10 + $0x38] sm:$0xff]
    %v801 = vld [vmem:[#allocation10 + $0x40] sm:$0xff]
    %v802 = vld [vmem:[#allocation10 + $0x48] sm:$0xff]
    %v803 = vld [vmem:[#allocation10 + $0x50] sm:$0xff]
    %v804 = vld [vmem:[#allocation10 + $0x58] sm:$0xff]
    %v805 = vld [vmem:[#allocation10 + $0x60] sm:$0xff]
    %v806 = vld [vmem:[#allocation10 + $0x68] sm:$0xff]
    %v807 = vld [vmem:[#allocation10 + $0x70] sm:$0xff]
    %v808 = vld [vmem:[#allocation10 + $0x78] sm:$0xff]
    %v809 = vld [vmem:[#allocation10 + $0x80] sm:$0xff]
    %v810 = vld [vmem:[#allocation10 + $0x88] sm:$0xff]
    %v811 = vld [vmem:[#allocation10 + $0x90] sm:$0xff]
    %v812 = vld [vmem:[#allocation10 + $0x98] sm:$0xff]
    %v813 = vld [vmem:[#allocation10 + $0xa0] sm:$0xff]
    %v814 = vld [vmem:[#allocation10 + $0xa8] sm:$0xff]
    %v815 = vld [vmem:[#allocation10 + $0xb0] sm:$0xff]
    %v816 = vld [vmem:[#allocation10 + $0xb8] sm:$0xff]
    %v817 = vld [vmem:[#allocation10 + $0xc0] sm:$0xff]
    %v818 = vld [vmem:[#allocation10 + $0xc8] sm:$0xff]
    %v819 = vld [vmem:[#allocation10 + $0xd0] sm:$0xff]
    %v820 = vld [vmem:[#allocation10 + $0xd8] sm:$0xff]
    %v821 = vld [vmem:[#allocation10 + $0xe0] sm:$0xff]
    %v822 = vld [vmem:[#allocation10 + $0xe8] sm:$0xff]
    %v823 = vld [vmem:[#allocation10 + $0xf0] sm:$0xff]
    %v824 = vld [vmem:[#allocation10 + $0xf8] sm:$0xff]
    %v825 = vld [vmem:[%s4] sm:$0x3]
    %v827 = vlaneseq
    %v828 = vshrl.u32 %v827, 7
    %v829 = vsub.s32 0, %v828
    %v830 = vrot.slane %v825, %v829
    %v831 = vlaneseq
    %v832 = vshrl.u32 %v831, 7
    %v833 = vsub.s32 1, %v832
    %v834 = vrot.slane %v825, %v833
    %837 = vmatprep.subr.mxu0 %v824
    %838 = vmatpush1.msra.mxu0 %v823
    %839 = vmatprep.subr.mxu0 %v822
    %840 = vmatpush1.msra.mxu0 %v821
    %841 = vmatprep.subr.mxu0 %v820
    %842 = vmatpush1.msra.mxu0 %v819
    %843 = vmatprep.subr.mxu0 %v818
    %844 = vmatpush1.msra.mxu0 %v817
    %845 = vmatprep.subr.mxu0 %v816
    %846 = vmatpush1.msra.mxu0 %v815
    %847 = vmatprep.subr.mxu0 %v814
    %848 = vmatpush1.msra.mxu0 %v813
    %849 = vmatprep.subr.mxu0 %v812
    %850 = vmatpush1.msra.mxu0 %v811
    %851 = vmatprep.subr.mxu0 %v810
    %852 = vmatpush1.msra.mxu0 %v809
    %853 = vmatprep.subr.mxu0 %v808
    %854 = vmatpush1.msra.mxu0 %v807
    %855 = vmatprep.subr.mxu0 %v806
    %856 = vmatpush1.msra.mxu0 %v805
    %857 = vmatprep.subr.mxu0 %v804
    %858 = vmatpush1.msra.mxu0 %v803
    %859 = vmatprep.subr.mxu0 %v802
    %860 = vmatpush1.msra.mxu0 %v801
    %861 = vmatprep.subr.mxu0 %v800
    %862 = vmatpush1.msra.mxu0 %v799
    %863 = vmatprep.subr.mxu0 %v798
    %864 = vmatpush1.msra.mxu0 %v797
    %865 = vmatprep.subr.mxu0 %v796
    %866 = vmatpush1.msra.mxu0 %v795
    %867 = vmatprep.subr.mxu0 %v794
    %868 = vmatpush1.msra.mxu0 %v793
    %869 = vmatprep.subr.mxu0 0.0
    %870 = vmatpush2.msra.mxu0 0.0
    %871 = vmatprep.subr.mxu0 0.0
    %872 = vmatpush2.msra.mxu0 0.0
    %873 = vmatprep.subr.mxu0 0.0
    %874 = vmatpush2.msra.mxu0 0.0
    %875 = vmatprep.subr.mxu0 0.0
    %876 = vmatpush2.msra.mxu0 0.0
    %877 = vmatprep.subr.mxu0 0.0
    %878 = vmatpush2.msra.mxu0 0.0
    %879 = vmatprep.subr.mxu0 0.0
    %880 = vmatpush2.msra.mxu0 0.0
    %881 = vmatprep.subr.mxu0 0.0
    %882 = vmatpush2.msra.mxu0 0.0
    %883 = vmatprep.subr.mxu0 0.0
    %884 = vmatpush2.msra.mxu0 0.0
    %885 = vmatprep.subr.mxu0 0.0
    %886 = vmatpush2.msra.mxu0 0.0
    %887 = vmatprep.subr.mxu0 0.0
    %888 = vmatpush2.msra.mxu0 0.0
    %889 = vmatprep.subr.mxu0 0.0
    %890 = vmatpush2.msra.mxu0 0.0
    %891 = vmatprep.subr.mxu0 0.0
    %892 = vmatpush2.msra.mxu0 0.0
    %893 = vmatprep.subr.mxu0 0.0
    %894 = vmatpush2.msra.mxu0 0.0
    %895 = vmatprep.subr.mxu0 0.0
    %896 = vmatpush2.msra.mxu0 0.0
    %897 = vmatprep.subr.mxu0 0.0
    %898 = vmatpush2.msra.mxu0 0.0
    %899 = vmatprep.subr.mxu0 0.0
    %900 = vmatpush2.msra.mxu0 0.0
    %901 = vmatprep.mubr.f32.mxu0 0.0
    %902 = vmatmul.mubr.f32.gmra.mxu0 %v791
    %v903 = vpop.f32.mrf.mxu0
    %v904 = vadd.f32 %v830, %v903
    %v905 = vpop.f32.mrf.mxu0
    %v906 = vadd.f32 %v834, %v905
    %907 = vmatprep.mubr.f32.mxu0 0.0
    %908 = vmatmul.mubr.f32.gmra.mxu0 %v792
    %v909 = vpop.f32.mrf.mxu0
    %v910 = vadd.f32 %v830, %v909
    %v911 = vpop.f32.mrf.mxu0
    %v912 = vadd.f32 %v834, %v911
    %913 = vdwg.mxu0
    %v914 = vxor.u32 %v906, 2147483648
    %v915 = vxor.u32 %v912, 2147483648
    %v916 = vmul.f32 %v914, 1.442695
    %v917 = vpow.pop %v916
    %v918 = vmul.f32 %v915, 1.442695
    %v919 = vpow.pop %v918
    %v920 = vadd.f32 %v917, 1.0
    %v921 = vadd.f32 %v919, 1.0
    %v922 = vrcp.pop %v920
    %v923 = vmul.f32 1.0, %v922
    %v924 = vrcp.pop %v921
    %v925 = vmul.f32 1.0, %v924
    %v926 = vmax.f32 %v904, 0.0
    %v927 = vmax.f32 %v910, 0.0
    %v928 = vld [vmem:[#allocation3] sm:$0xff]
    %v929 = vld [vmem:[#allocation3 + $0x8] sm:$0xff]
    %v930 = vld [vmem:[%s6] sm:$0xff]
    %v931 = vld [vmem:[%s6 + $0x8] sm:$0xff]
    %v932 = vld [vmem:[%s7] sm:$0xff]
    %v933 = vld [vmem:[%s7 + $0x8] sm:$0xff]
    %vm934 = vcmp.lt.f32.partialorder %v928, 1.0
    %vm935 = vcmp.lt.f32.partialorder %v929, 1.0
    %v936 = vsel %vm934, 1.0, 0.0
    %v937 = vsel %vm935, 1.0, 0.0
    %v938 = vmul.f32 %v923, %v936
    %v939 = vmul.f32 %v925, %v937
    %v940 = vadd.f32 %v928, %v938
    %v941 = vadd.f32 %v929, %v939
    %vm942 = vcmp.gt.f32.partialorder %v940, 0.9
    %vm943 = vcmp.gt.f32.partialorder %v941, 0.9
    %v944 = vsel %vm942, %v936, 0.0
    %v945 = vsel %vm943, %v937, 0.0
    %vm946 = vcmp.le.f32.partialorder %v940, 0.9
    %vm947 = vcmp.le.f32.partialorder %v941, 0.9
    %v948 = vsel %vm946, %v936, 0.0
    %v949 = vsel %vm947, %v937, 0.0
    %v950 = vmul.f32 %v923, %v948
    %v951 = vmul.f32 %v925, %v949
    %v952 = vadd.f32 %v928, %v950
    %v953 = vadd.f32 %v929, %v951
    %v954 = vsub.f32 1.0, %v952
    %v955 = vsub.f32 1.0, %v953
    %v956 = vmul.f32 %v944, %v954
    %v957 = vmul.f32 %v945, %v955
    %v958 = vadd.f32 %v930, %v956
    %v959 = vadd.f32 %v931, %v957
    %v960 = vmul.f32 %v944, %v958
    %v961 = vmul.f32 %v945, %v959
    %v962 = vadd.f32 %v952, %v960
    %v963 = vadd.f32 %v953, %v961
    %v964 = vadd.f32 %v932, %v948
    %v965 = vadd.f32 %v933, %v949
    %v966 = vadd.f32 %v964, %v944
    %v967 = vadd.f32 %v965, %v945
    %v968 = vadd.f32 %v950, %v960
    %v969 = vadd.f32 %v951, %v961
    %971 = vset.pattern.permute.xlu0 0
    %972 = vperm.xlu0 %971, %v968
    %v973 = vpop.permute.xlu0 %972
    %976 = vset.pattern.permute.xlu0 0
    %977 = vperm.xlu0 %976, %v969
    %v978 = vpop.permute.xlu0 %977
    %v980 = vmul.f32 %v926, %v973
    %v981 = vmul.f32 %v927, %v978
    %v982 = vld [vmem:[#allocation12] sm:$0xff]
    %v983 = vld [vmem:[#allocation12 + $0x8] sm:$0xff]
    %v984 = vsub.f32 1.0, %v968
    %v985 = vsub.f32 1.0, %v969
    %987 = vset.pattern.permute.xlu0 0
    %988 = vperm.xlu0 %987, %v984
    %v989 = vpop.permute.xlu0 %988
    %992 = vset.pattern.permute.xlu0 0
    %993 = vperm.xlu0 %992, %v985
    %v994 = vpop.permute.xlu0 %993
    %v996 = vmul.f32 %v982, %v989
    %v997 = vmul.f32 %v983, %v994
    %v998 = vadd.f32 %v980, %v996
    %v999 = vadd.f32 %v981, %v997
    %1000 = vst [vmem:[#allocation12] sm:$0xff] %v998
    %1001 = vst [vmem:[#allocation12 + $0x8] sm:$0xff] %v999
    %1002 = vst [vmem:[#allocation2] sm:$0xff] %v926
    %1003 = vst [vmem:[#allocation2 + $0x8] sm:$0xff] %v927
    %1004 = vst.msk [vmem:[#allocation3] sm:$0xff] %vm81, %v962
    %1005 = vst.msk [vmem:[#allocation3 + $0x8] sm:$0xff] %vm81, %v963
    %1006 = vst.msk [vmem:[%s6] sm:$0xff] %vm81, %v958
    %1007 = vst.msk [vmem:[%s6 + $0x8] sm:$0xff] %vm81, %v959
    %1008 = vst.msk [vmem:[%s7] sm:$0xff] %vm81, %v966
    %1009 = vst.msk [vmem:[%s7 + $0x8] sm:$0xff] %vm81, %v967
    // Predicated region
    $region38: #{tpu_custom_call.1} parent=1 // pred_check
      _
    $region39: #{tpu_custom_call.1} parent=1 // pred_check_branch
      %1011 = sbr.rel (0) target = $region41
    $region40: #{tpu_custom_call.1} parent=1 // pred_region
      %s1013 = ssub.s32 256, 256
      %1014 = vsyncadd [#allocation6], %s1013
      %s1015 = sshll.u32 [#allocation12], 4
      %s1016 = int_to_ptr.vmem [resolvable:$true] %s1015
      %1021 = dma.vmem_to_hbm [thread:$0]  %s1016, 256, %s5, [#allocation6], 128, 128, 8
    $region41: #{tpu_custom_call.1} parent=1 // pred_fallthru
      _
    // Predicated region
    $region42: #{tpu_custom_call.1} parent=1 // pred_check
      _
    $region43: #{tpu_custom_call.1} parent=1 // pred_check_branch
      %1023 = sbr.rel (0) target = $region45
    $region44: #{tpu_custom_call.1} parent=1 // pred_region
      _
    $region45: #{tpu_custom_call.1} parent=1 // pred_fallthru
      _
    // Predicated region
    $region46: #{tpu_custom_call.1} parent=1 // pred_check
      _
    $region47: #{tpu_custom_call.1} parent=1 // pred_check_branch
      %1025 = sbr.rel (0) target = $region49
    $region48: #{tpu_custom_call.1} parent=1 // pred_region
      _
    $region49: #{tpu_custom_call.1} parent=1 // pred_fallthru
      _
    // Predicated region
    $region50: #{tpu_custom_call.1} parent=1 // pred_check
      _
    $region51: #{tpu_custom_call.1} parent=1 // pred_check_branch
      %1027 = sbr.rel (0) target = $region53
    $region52: #{tpu_custom_call.1} parent=1 // pred_region
      %1028 = dma.done [#allocation6], 256
    $region53: #{tpu_custom_call.1} parent=1 // pred_fallthru
      _
    // Predicated region
    $region54: #{tpu_custom_call.1} parent=1 // pred_check
      _
    $region55: #{tpu_custom_call.1} parent=1 // pred_check_branch
      %1030 = sbr.rel (0) target = $region57
    $region56: #{tpu_custom_call.1} parent=1 // pred_region
      _
    $region57: #{tpu_custom_call.1} parent=1 // pred_fallthru
      _
    // Predicated region
    $region58: #{tpu_custom_call.1} parent=1 // pred_check
      _
    $region59: #{tpu_custom_call.1} parent=1 // pred_check_branch
      %1032 = sbr.rel (0) target = $region61
    $region60: #{tpu_custom_call.1} parent=1 // pred_region
      _
    $region61: #{tpu_custom_call.1} parent=1 // pred_fallthru
      _
    %1033 = vsyncpa [#allocation5], 1
    %1034 = vsyncpa [#allocation8], 1
    %1035 = vsyncpa [#allocation11], 1
    %1036 = vsyncpa [#allocation6], 1

</llo_original>
